<compile_context>
chip_gen: v6e
topology: v6e:2x2x1
jax: 0.10.0
libtpu: 0.0.40
codegen_flags: <defaults>
</compile_context>

<pallas_src>
import math
import numpy as np

import jax
import jax.numpy as jnp
from jax.experimental import pallas as pl
from jax.experimental.pallas import tpu as pltpu

# ------------------------- module hyper-parameters --------------------------
DIM = 32                      # dim
WINDOW = (4, 4)               # window_size
NUM_HEADS = 2                 # num_heads
HEAD_DIM = DIM // NUM_HEADS
N_TOK = WINDOW[0] * WINDOW[1]

# only used to build a realistic example shift mask in __main__
INPUT_RES = (8, 8)
SHIFT = (2, 2)
N_WIN = (INPUT_RES[0] // WINDOW[0]) * (INPUT_RES[1] // WINDOW[1])

BLK_ROWS = 128                # tokens (= whole windows * N) per grid step
NEG_MASK = -1e9               # off-window block-diagonal additive mask


# ----------------------- static relative-position index ---------------------
def make_rel_pos_index():
    ws0, ws1 = WINDOW
    coords = np.stack(np.meshgrid(np.arange(ws0), np.arange(ws1), indexing="ij"))
    cf = coords.reshape(2, -1)
    rel = cf[:, :, None] - cf[:, None, :]
    rel = rel.transpose(1, 2, 0).copy()
    rel[:, :, 0] += ws0 - 1
    rel[:, :, 1] += ws1 - 1
    rel[:, :, 0] *= 2 * ws1 - 1
    return rel.sum(-1)                                        # (N, N) int


REL_POS_INDEX = make_rel_pos_index()


def make_shift_mask():
    """Example (0 / -100) shift mask as produced by SwinTransformerBlock."""
    H, W = INPUT_RES
    ws0, ws1 = WINDOW
    ss0, ss1 = SHIFT
    img = np.zeros((1, H, W, 1))
    h_sl = (slice(0, -ws0), slice(-ws0, -ss0), slice(-ss0, None))
    w_sl = (slice(0, -ws1), slice(-ws1, -ss1), slice(-ss1, None))
    cnt = 0
    for hs in h_sl:
        for wsl in w_sl:
            img[:, hs, wsl, :] = cnt
            cnt += 1
    mw = img.reshape(1, H // ws0, ws0, W // ws1, ws1, 1)
    mw = mw.transpose(0, 1, 3, 2, 4, 5).reshape(-1, ws0 * ws1)
    am = mw[:, None, :] - mw[:, :, None]
    return np.where(am != 0, -100.0, 0.0).astype(np.float32)  # (nW, N, N)


# ------------------------------ Pallas kernel --------------------------------
def _window_attention_kernel(x_ref, wqkv_ref, bqkv_ref, wproj_ref, bproj_ref,
                             bias_ref, o_ref):
    """One row-block of `blk` tokens (= blk//N whole windows).

    Attention for all windows in the block is computed as a single
    block-diagonal (blk, blk) score matrix per head: `bias_ref` already holds
    rel-pos bias (+ shift mask) on the diagonal blocks and -1e9 off-diagonal,
    so one full-lane softmax reproduces the per-window softmax exactly.
    """
    blk, C = x_ref.shape                        # (BLK, C)
    n_heads = bias_ref.shape[1]                 # (1, nH, blk, blk)
    head_dim = C // n_heads
    scale = head_dim ** (-0.5)

    x = x_ref[...]
    # Fused QKV projection: one (blk, C) x (C, 3C) MXU matmul.
    qkv = jnp.dot(x, wqkv_ref[...],
                  preferred_element_type=jnp.float32) + bqkv_ref[...]   # (blk, 3C)

    head_outs = []
    for h in range(n_heads):                    # static unroll (2 heads)
        lo = h * head_dim
        q = qkv[:, lo:lo + head_dim] * scale
        k = qkv[:, C + lo:C + lo + head_dim]
        v = qkv[:, 2 * C + lo:2 * C + lo + head_dim]
        # (blk, hd) @ (hd, blk) -> (blk, blk) block-diagonal scores.
        s = jax.lax.dot_general(q, k, (((1,), (1,)), ((), ())),
                                preferred_element_type=jnp.float32)
        s = s + bias_ref[0, h]                  # rel-pos bias + shift/window mask
        s = s - jnp.max(s, axis=-1, keepdims=True)
        p = jnp.exp(s)                          # off-window entries underflow to 0
        denom = jnp.sum(p, axis=-1, keepdims=True)
        av = jnp.dot(p, v, preferred_element_type=jnp.float32)   # (blk, hd)
        # Normalize after AV: (blk, hd) scale instead of (blk, blk); EUP recip.
        head_outs.append(av * pl.reciprocal(denom, approx=True))
    av = jnp.concatenate(head_outs, axis=-1)                      # (blk, C)
    # Output projection: one (blk, C) x (C, C) MXU matmul.
    o_ref[...] = jnp.dot(av, wproj_ref[...],
                         preferred_element_type=jnp.float32) + bproj_ref[...]


# --------------------------------- wrapper -----------------------------------
@jax.jit
def window_attention_forward(x, params, mask=None):
    """x: (num_windows*B, N, C); mask: (nW, N, N) with 0/-100 entries or None."""
    B_, N, C = x.shape
    M = B_ * N
    blk = BLK_ROWS if (M >= BLK_ROWS and M % BLK_ROWS == 0) else M
    nblk = M // blk
    win_per_blk = blk // N

    # relative position bias: (nH, N, N)
    rel = params["rpb_table"][REL_POS_INDEX.reshape(-1)]
    rel = rel.reshape(N, N, NUM_HEADS).transpose(2, 0, 1).astype(jnp.float32)

    # per-window additive bias (B_, nH, N, N)
    if mask is None:
        per_win = jnp.broadcast_to(rel[None], (B_, NUM_HEADS, N, N))
    else:
        nW = mask.shape[0]
        pw = rel[None] + mask[:, None].astype(jnp.float32)        # (nW, nH, N, N)
        per_win = jnp.broadcast_to(
            pw[None], (B_ // nW, nW, NUM_HEADS, N, N)).reshape(B_, NUM_HEADS, N, N)

    # block-diagonal bias per row-block: (nblk, nH, blk, blk)
    pw = per_win.reshape(nblk, win_per_blk, NUM_HEADS, N, N).transpose(0, 2, 1, 3, 4)
    eye = jnp.eye(win_per_blk, dtype=bool)                        # (W, W)
    bias = jnp.where(eye[None, None, :, None, :, None],           # (1,1,W,1,W,1)
                     pw[:, :, :, :, None, :],                     # (nblk,nH,W,N,1,N)
                     jnp.float32(NEG_MASK))
    bias = bias.reshape(nblk, NUM_HEADS, blk, blk)

    x2 = x.reshape(M, C).astype(jnp.float32)
    out = pl.pallas_call(
        _window_attention_kernel,
        out_shape=jax.ShapeDtypeStruct((M, C), jnp.float32),
        grid=(nblk,),
        in_specs=[
            pl.BlockSpec((blk, C), lambda b: (b, 0)),
            pl.BlockSpec((C, 3 * C), lambda b: (0, 0)),           # VMEM-resident
            pl.BlockSpec((1, 3 * C), lambda b: (0, 0)),
            pl.BlockSpec((C, C), lambda b: (0, 0)),
            pl.BlockSpec((1, C), lambda b: (0, 0)),
            pl.BlockSpec((1, NUM_HEADS, blk, blk), lambda b: (b, 0, 0, 0)),
        ],
        out_specs=pl.BlockSpec((blk, C), lambda b: (b, 0)),
        compiler_params=pltpu.CompilerParams(
            dimension_semantics=("parallel",)),
    )(x2, params["w_qkv"], params["b_qkv"],
      params["w_proj"], params["b_proj"], bias)
    return out.reshape(B_, N, C)


# ------------------------- pure-JAX reference (check) ------------------------
def window_attention_reference(x, params, mask=None):
    B_, N, C = x.shape
    nH, hd = NUM_HEADS, C // NUM_HEADS
    qkv = x @ params["w_qkv"] + params["b_qkv"]               # (B_, N, 3C)
    qkv = qkv.reshape(B_, N, 3, nH, hd).transpose(2, 0, 3, 1, 4)
    q, k, v = qkv[0], qkv[1], qkv[2]
    q = q * (hd ** (-0.5))
    attn = jnp.einsum("bhnd,bhmd->bhnm", q, k)
    rel = params["rpb_table"][REL_POS_INDEX.reshape(-1)]
    rel = rel.reshape(N, N, nH).transpose(2, 0, 1)
    attn = attn + rel[None]
    if mask is not None:
        nW = mask.shape[0]
        attn = attn.reshape(B_ // nW, nW, nH, N, N) + mask[None, :, None]
        attn = attn.reshape(B_, nH, N, N)
    attn = jax.nn.softmax(attn, axis=-1)
    out = jnp.einsum("bhnm,bhmd->bhnd", attn, v)
    out = out.transpose(0, 2, 1, 3).reshape(B_, N, C)
    return out @ params["w_proj"] + params["b_proj"]


# ----------------------------- parameter init --------------------------------
def init_params(key):
    def lin(k, fan_in, shape):
        bound = 1.0 / math.sqrt(fan_in)
        return jax.random.uniform(k, shape, jnp.float32, -bound, bound)

    ks = jax.random.split(key, 5)
    table = 0.02 * jax.random.truncated_normal(
        ks[4], -2.0, 2.0,
        ((2 * WINDOW[0] - 1) * (2 * WINDOW[1] - 1), NUM_HEADS), jnp.float32)
    return dict(
        w_qkv=lin(ks[0], DIM, (DIM, 3 * DIM)),    # qkv Linear weight (in, out)
        b_qkv=lin(ks[1], DIM, (1, 3 * DIM)),
        w_proj=lin(ks[2], DIM, (DIM, DIM)),       # proj Linear weight (in, out)
        b_proj=lin(ks[3], DIM, (1, DIM)),
        rpb_table=table,                          # relative_position_bias_table
    )


# ---------------------------------- main -------------------------------------
if __name__ == "__main__":
    key = jax.random.PRNGKey(0)
    params = init_params(jax.random.fold_in(key, 123))

    B = 2
    x = jax.random.normal(jax.random.fold_in(key, 7),
                          (B * N_WIN, N_TOK, DIM), jnp.float32)
    mask = jnp.asarray(make_shift_mask())                     # (nW, N, N)

    # W-MSA (no mask) and SW-MSA (shifted-window mask) paths.
    out_plain = jax.block_until_ready(window_attention_forward(x, params, None))
    out_masked = jax.block_until_ready(window_attention_forward(x, params, mask))

    ref_plain = window_attention_reference(x, params, None)
    ref_masked = window_attention_reference(x, params, mask)

    assert out_plain.shape == (B * N_WIN, N_TOK, DIM), out_plain.shape
    assert out_masked.shape == (B * N_WIN, N_TOK, DIM), out_masked.shape
    assert bool(jnp.all(jnp.isfinite(out_plain)))
    assert bool(jnp.all(jnp.isfinite(out_masked)))
    err = max(float(jnp.max(jnp.abs(out_plain - ref_plain))),
              float(jnp.max(jnp.abs(out_masked - ref_masked))))
    assert err < 2e-2, f"mismatch vs pure-JAX reference: {err}"
    print("KERNEL_OK")
</pallas_src>

<mosaic_0001>
module attributes {stable_mosaic.version = 11 : i64} {
  func.func @_window_attention_kernel(%arg0: i32, %arg1: memref<128x32xf32, #tpu.memory_space<vmem>>, %arg2: memref<32x96xf32, #tpu.memory_space<vmem>>, %arg3: memref<1x96xf32, #tpu.memory_space<vmem>>, %arg4: memref<32x32xf32, #tpu.memory_space<vmem>>, %arg5: memref<1x32xf32, #tpu.memory_space<vmem>>, %arg6: memref<1x2x128x128xf32, #tpu.memory_space<vmem>>, %arg7: memref<128x32xf32, #tpu.memory_space<vmem>>) attributes {dimension_semantics = [#tpu.dimension_semantics<parallel>], iteration_bounds = array<i64: 1>, scalar_prefetch = 0 : i64, scratch_operands = 0 : i64, tpu.core_type = #tpu.core_type<tc>, window_params = [{transform_indices = @transform_0, window_bounds = array<i64: 128, 32>}, {pipeline_mode = #tpu.pipeline_mode<synchronous>, transform_indices = @transform_1, window_bounds = array<i64: 32, 96>}, {pipeline_mode = #tpu.pipeline_mode<synchronous>, transform_indices = @transform_2, window_bounds = array<i64: 1, 96>}, {pipeline_mode = #tpu.pipeline_mode<synchronous>, transform_indices = @transform_3, window_bounds = array<i64: 32, 32>}, {pipeline_mode = #tpu.pipeline_mode<synchronous>, transform_indices = @transform_4, window_bounds = array<i64: 1, 32>}, {transform_indices = @transform_5, window_bounds = array<i64: 1, 2, 128, 128>}, {transform_indices = @transform_6, window_bounds = array<i64: 128, 32>}]} {
    %c0 = arith.constant 0 : index
    %c0_0 = arith.constant 0 : index
    %0 = vector.load %arg1[%c0, %c0_0] : memref<128x32xf32, #tpu.memory_space<vmem>>, vector<128x32xf32>
    %c0_1 = arith.constant 0 : index
    %c0_2 = arith.constant 0 : index
    %1 = vector.load %arg2[%c0_1, %c0_2] : memref<32x96xf32, #tpu.memory_space<vmem>>, vector<32x96xf32>
    %cst = arith.constant dense<0.000000e+00> : vector<128x96xf32>
    %2 = tpu.matmul %0, %1, %cst {dimension_numbers = #tpu.dot_dimension_numbers<[1], [0], [0], [1], [0, 0, 1, 1], [], []>} : vector<128x32xf32>, vector<32x96xf32>, vector<128x96xf32> -> vector<128x96xf32>
    %c0_3 = arith.constant 0 : index
    %c0_4 = arith.constant 0 : index
    %3 = vector.load %arg3[%c0_3, %c0_4] : memref<1x96xf32, #tpu.memory_space<vmem>>, vector<1x96xf32>
    %4 = vector.broadcast %3 : vector<1x96xf32> to vector<128x96xf32>
    %5 = arith.addf %2, %4 : vector<128x96xf32>
    %6 = vector.extract_strided_slice %5 {offsets = [0, 0], sizes = [128, 16], strides = [1, 1]} : vector<128x96xf32> to vector<128x16xf32>
    %cst_5 = arith.constant 2.500000e-01 : f32
    %7 = vector.broadcast %cst_5 : f32 to vector<128x16xf32>
    %8 = arith.mulf %6, %7 : vector<128x16xf32>
    %9 = vector.extract_strided_slice %5 {offsets = [0, 32], sizes = [128, 16], strides = [1, 1]} : vector<128x96xf32> to vector<128x16xf32>
    %10 = vector.extract_strided_slice %5 {offsets = [0, 64], sizes = [128, 16], strides = [1, 1]} : vector<128x96xf32> to vector<128x16xf32>
    %cst_6 = arith.constant dense<0.000000e+00> : vector<128x128xf32>
    %11 = tpu.matmul %8, %9, %cst_6 {dimension_numbers = #tpu.dot_dimension_numbers<[1], [1], [0], [0], [0, 0, 1, 0], [], []>} : vector<128x16xf32>, vector<128x16xf32>, vector<128x128xf32> -> vector<128x128xf32>
    %c0_7 = arith.constant 0 : index
    %c0_8 = arith.constant 0 : index
    %c0_9 = arith.constant 0 : index
    %c0_10 = arith.constant 0 : index
    %12 = vector.load %arg6[%c0_7, %c0_8, %c0_9, %c0_10] : memref<1x2x128x128xf32, #tpu.memory_space<vmem>>, vector<1x1x128x128xf32>
    %13 = vector.shape_cast %12 : vector<1x1x128x128xf32> to vector<128x128xf32>
    %14 = arith.addf %11, %13 : vector<128x128xf32>
    %cst_11 = arith.constant dense<0xFF800000> : vector<128xf32>
    %15 = vector.multi_reduction <maximumf>, %14, %cst_11 [1] : vector<128x128xf32> to vector<128xf32>
    %16 = vector.shape_cast %15 : vector<128xf32> to vector<128x1xf32>
    %17 = vector.broadcast %16 : vector<128x1xf32> to vector<128x128xf32>
    %18 = arith.subf %14, %17 : vector<128x128xf32>
    %19 = math.exp %18 : vector<128x128xf32>
    %cst_12 = arith.constant dense<0.000000e+00> : vector<128xf32>
    %20 = vector.multi_reduction <add>, %19, %cst_12 [1] : vector<128x128xf32> to vector<128xf32>
    %21 = vector.shape_cast %20 : vector<128xf32> to vector<128x1xf32>
    %cst_13 = arith.constant dense<0.000000e+00> : vector<128x16xf32>
    %22 = tpu.matmul %19, %10, %cst_13 {dimension_numbers = #tpu.dot_dimension_numbers<[1], [0], [0], [1], [0, 0, 1, 1], [], []>} : vector<128x128xf32>, vector<128x16xf32>, vector<128x16xf32> -> vector<128x16xf32>
    %23 = tpu.reciprocal %21 {approx = true} : vector<128x1xf32> -> vector<128x1xf32>
    %24 = vector.broadcast %23 : vector<128x1xf32> to vector<128x16xf32>
    %25 = arith.mulf %22, %24 : vector<128x16xf32>
    %26 = vector.extract_strided_slice %5 {offsets = [0, 16], sizes = [128, 16], strides = [1, 1]} : vector<128x96xf32> to vector<128x16xf32>
    %cst_14 = arith.constant 2.500000e-01 : f32
    %27 = vector.broadcast %cst_14 : f32 to vector<128x16xf32>
    %28 = arith.mulf %26, %27 : vector<128x16xf32>
    %29 = vector.extract_strided_slice %5 {offsets = [0, 48], sizes = [128, 16], strides = [1, 1]} : vector<128x96xf32> to vector<128x16xf32>
    %30 = vector.extract_strided_slice %5 {offsets = [0, 80], sizes = [128, 16], strides = [1, 1]} : vector<128x96xf32> to vector<128x16xf32>
    %cst_15 = arith.constant dense<0.000000e+00> : vector<128x128xf32>
    %31 = tpu.matmul %28, %29, %cst_15 {dimension_numbers = #tpu.dot_dimension_numbers<[1], [1], [0], [0], [0, 0, 1, 0], [], []>} : vector<128x16xf32>, vector<128x16xf32>, vector<128x128xf32> -> vector<128x128xf32>
    %c0_16 = arith.constant 0 : index
    %c1 = arith.constant 1 : index
    %c0_17 = arith.constant 0 : index
    %c0_18 = arith.constant 0 : index
    %32 = vector.load %arg6[%c0_16, %c1, %c0_17, %c0_18] : memref<1x2x128x128xf32, #tpu.memory_space<vmem>>, vector<1x1x128x128xf32>
    %33 = vector.shape_cast %32 : vector<1x1x128x128xf32> to vector<128x128xf32>
    %34 = arith.addf %31, %33 : vector<128x128xf32>
    %cst_19 = arith.constant dense<0xFF800000> : vector<128xf32>
    %35 = vector.multi_reduction <maximumf>, %34, %cst_19 [1] : vector<128x128xf32> to vector<128xf32>
    %36 = vector.shape_cast %35 : vector<128xf32> to vector<128x1xf32>
    %37 = vector.broadcast %36 : vector<128x1xf32> to vector<128x128xf32>
    %38 = arith.subf %34, %37 : vector<128x128xf32>
    %39 = math.exp %38 : vector<128x128xf32>
    %cst_20 = arith.constant dense<0.000000e+00> : vector<128xf32>
    %40 = vector.multi_reduction <add>, %39, %cst_20 [1] : vector<128x128xf32> to vector<128xf32>
    %41 = vector.shape_cast %40 : vector<128xf32> to vector<128x1xf32>
    %cst_21 = arith.constant dense<0.000000e+00> : vector<128x16xf32>
    %42 = tpu.matmul %39, %30, %cst_21 {dimension_numbers = #tpu.dot_dimension_numbers<[1], [0], [0], [1], [0, 0, 1, 1], [], []>} : vector<128x128xf32>, vector<128x16xf32>, vector<128x16xf32> -> vector<128x16xf32>
    %43 = tpu.reciprocal %41 {approx = true} : vector<128x1xf32> -> vector<128x1xf32>
    %44 = vector.broadcast %43 : vector<128x1xf32> to vector<128x16xf32>
    %45 = arith.mulf %42, %44 : vector<128x16xf32>
    %46 = tpu.concatenate %25, %45 in 1 : vector<128x16xf32>, vector<128x16xf32> -> vector<128x32xf32>
    %c0_22 = arith.constant 0 : index
    %c0_23 = arith.constant 0 : index
    %47 = vector.load %arg4[%c0_22, %c0_23] : memref<32x32xf32, #tpu.memory_space<vmem>>, vector<32x32xf32>
    %cst_24 = arith.constant dense<0.000000e+00> : vector<128x32xf32>
    %48 = tpu.matmul %46, %47, %cst_24 {dimension_numbers = #tpu.dot_dimension_numbers<[1], [0], [0], [1], [0, 0, 1, 1], [], []>} : vector<128x32xf32>, vector<32x32xf32>, vector<128x32xf32> -> vector<128x32xf32>
    %c0_25 = arith.constant 0 : index
    %c0_26 = arith.constant 0 : index
    %49 = vector.load %arg5[%c0_25, %c0_26] : memref<1x32xf32, #tpu.memory_space<vmem>>, vector<1x32xf32>
    %50 = vector.broadcast %49 : vector<1x32xf32> to vector<128x32xf32>
    %51 = arith.addf %48, %50 : vector<128x32xf32>
    %c0_27 = arith.constant 0 : index
    %c0_28 = arith.constant 0 : index
    %52 = vector.load %arg7[%c0_27, %c0_28] : memref<128x32xf32, #tpu.memory_space<vmem>>, vector<128x32xf32>
    tpu.vector_store %arg7[%c0_27, %c0_28], %51 {strides = array<i32>} : memref<128x32xf32, #tpu.memory_space<vmem>>, vector<128x32xf32>,
    return
  }
  func.func @transform_0(%arg0: i32) -> (i32, i32) {
    %c0_i32 = arith.constant 0 : i32
    %c0_i32_0 = arith.constant 0 : i32
    return %arg0, %c0_i32 : i32, i32
  }
  func.func @transform_1(%arg0: i32) -> (i32, i32) {
    %c0_i32 = arith.constant 0 : i32
    %c0_i32_0 = arith.constant 0 : i32
    %c0_i32_1 = arith.constant 0 : i32
    return %c0_i32, %c0_i32_0 : i32, i32
  }
  func.func @transform_2(%arg0: i32) -> (i32, i32) {
    %c0_i32 = arith.constant 0 : i32
    %c0_i32_0 = arith.constant 0 : i32
    %c0_i32_1 = arith.constant 0 : i32
    return %c0_i32, %c0_i32_0 : i32, i32
  }
  func.func @transform_3(%arg0: i32) -> (i32, i32) {
    %c0_i32 = arith.constant 0 : i32
    %c0_i32_0 = arith.constant 0 : i32
    %c0_i32_1 = arith.constant 0 : i32
    return %c0_i32, %c0_i32_0 : i32, i32
  }
  func.func @transform_4(%arg0: i32) -> (i32, i32) {
    %c0_i32 = arith.constant 0 : i32
    %c0_i32_0 = arith.constant 0 : i32
    %c0_i32_1 = arith.constant 0 : i32
    return %c0_i32, %c0_i32_0 : i32, i32
  }
  func.func @transform_5(%arg0: i32) -> (i32, i32, i32, i32) {
    %c0_i32 = arith.constant 0 : i32
    %c0_i32_0 = arith.constant 0 : i32
    %c0_i32_1 = arith.constant 0 : i32
    %c0_i32_2 = arith.constant 0 : i32
    return %arg0, %c0_i32, %c0_i32_0, %c0_i32_1 : i32, i32, i32, i32
  }
  func.func @transform_6(%arg0: i32) -> (i32, i32) {
    %c0_i32 = arith.constant 0 : i32
    %c0_i32_0 = arith.constant 0 : i32
    return %arg0, %c0_i32 : i32, i32
  }
}

</mosaic_0001>

<llo_original>
// kernel: window_attention_forward.1
$region0: #{window_attention_forward.1}
  #allocation0 [shape = 'u32[]', space=smem, size = 0x4, offset = 0x4, fixed_abs, tag = 'smem constant byte address 0x4 - core index']
  #allocation1 [shape = 'u32[144,128]{1,0:T(1,128)}', space=vmem, size = 0x12000, scoped, tag = 'internal scratch']
  %s0 = inlined_call_operand.vmem [shape: f32[128,32], index: 0, kind: input, shape index: {}]
  %s1 = inlined_call_operand.vmem [shape: f32[32,96], index: 1, kind: input, shape index: {}]
  %s2 = inlined_call_operand.vmem [shape: f32[1,96], index: 2, kind: input, shape index: {}]
  %s3 = inlined_call_operand.vmem [shape: f32[32,32], index: 3, kind: input, shape index: {}]
  %s4 = inlined_call_operand.vmem [shape: f32[1,32], index: 4, kind: input, shape index: {}]
  %s5 = inlined_call_operand.vmem [shape: f32[1,2,128,128], index: 5, kind: input, shape index: {}]
  %s6 = inlined_call_operand.hbm [shape: f32[128,32], index: 6, kind: output, shape index: {}]
  %s7 = sld [smem:[#allocation0]]
  $region34: #{window_attention_forward.1} parent=0
    _
  %s9 = ssub.s32 1, %s7
  %s10 = scalar_select 0, %s9, %s7
  $region1: #{window_attention_forward.1} parent=0
    #allocation2 [shape = 'u8[65536]{0}', space=vmem, size = 0x10000, scoped, tag = 'output window, operand 0, single buffered']
    #allocation3 [shape = 's32[1]{0}', space=sflag, size = 0x4, scoped, tag = 'scoped memory for window_attention_forward.1']
    %11 = vsyncpa [#allocation3], 0
    // Predicated region
    $region2: #{window_attention_forward.1} parent=1 // pred_check
      _
    $region3: #{window_attention_forward.1} parent=1 // pred_check_branch
      %13 = sbr.rel (0) target = $region5
    $region4: #{window_attention_forward.1} parent=1 // pred_region
      _
    $region5: #{window_attention_forward.1} parent=1 // pred_fallthru
      _
    // Predicated region
    $region6: #{window_attention_forward.1} parent=1 // pred_check
      _
    $region7: #{window_attention_forward.1} parent=1 // pred_check_branch
      %15 = sbr.rel (0) target = $region9
    $region8: #{window_attention_forward.1} parent=1 // pred_region
      _
    $region9: #{window_attention_forward.1} parent=1 // pred_fallthru
      _
    // Predicated region
    $region10: #{window_attention_forward.1} parent=1 // pred_check
      _
    $region11: #{window_attention_forward.1} parent=1 // pred_check_branch
      %17 = sbr.rel (0) target = $region13
    $region12: #{window_attention_forward.1} parent=1 // pred_region
      _
    $region13: #{window_attention_forward.1} parent=1 // pred_fallthru
      _
    // Predicated region
    $region14: #{window_attention_forward.1} parent=1 // pred_check
      _
    $region15: #{window_attention_forward.1} parent=1 // pred_check_branch
      %19 = sbr.rel (0) target = $region17
    $region16: #{window_attention_forward.1} parent=1 // pred_region
      _
    $region17: #{window_attention_forward.1} parent=1 // pred_fallthru
      _
    // Predicated region
    $region18: #{window_attention_forward.1} parent=1 // pred_check
      _
    $region19: #{window_attention_forward.1} parent=1 // pred_check_branch
      %21 = sbr.rel (0) target = $region21
    $region20: #{window_attention_forward.1} parent=1 // pred_region
      _
    $region21: #{window_attention_forward.1} parent=1 // pred_fallthru
      _
    // Predicated region
    $region22: #{window_attention_forward.1} parent=1 // pred_check
      _
    $region23: #{window_attention_forward.1} parent=1 // pred_check_branch
      %23 = sbr.rel (0) target = $region25
    $region24: #{window_attention_forward.1} parent=1 // pred_region
      _
    $region25: #{window_attention_forward.1} parent=1 // pred_fallthru
      _
    %v24 = vld [vmem:[%s0] sm:$0xff]
    %v25 = vld [vmem:[%s0 + $0x8] sm:$0xff]
    %v26 = vld [vmem:[%s0 + $0x10] sm:$0xff]
    %v27 = vld [vmem:[%s0 + $0x18] sm:$0xff]
    %v28 = vld [vmem:[%s0 + $0x20] sm:$0xff]
    %v29 = vld [vmem:[%s0 + $0x28] sm:$0xff]
    %v30 = vld [vmem:[%s0 + $0x30] sm:$0xff]
    %v31 = vld [vmem:[%s0 + $0x38] sm:$0xff]
    %v32 = vld [vmem:[%s0 + $0x40] sm:$0xff]
    %v33 = vld [vmem:[%s0 + $0x48] sm:$0xff]
    %v34 = vld [vmem:[%s0 + $0x50] sm:$0xff]
    %v35 = vld [vmem:[%s0 + $0x58] sm:$0xff]
    %v36 = vld [vmem:[%s0 + $0x60] sm:$0xff]
    %v37 = vld [vmem:[%s0 + $0x68] sm:$0xff]
    %v38 = vld [vmem:[%s0 + $0x70] sm:$0xff]
    %v39 = vld [vmem:[%s0 + $0x78] sm:$0xff]
    %v40 = vld [vmem:[%s1] sm:$0xff]
    %v41 = vld [vmem:[%s1 + $0x8] sm:$0xff]
    %v42 = vld [vmem:[%s1 + $0x10] sm:$0xff]
    %v43 = vld [vmem:[%s1 + $0x18] sm:$0xff]
    %v44 = vld [vmem:[%s2] sm:$0x1]
    %v46 = vlaneseq
    %v47 = vshrl.u32 %v46, 7
    %v48 = vsub.s32 0, %v47
    %v49 = vrot.slane %v44, %v48
    %vm51 = vcmask 261120
    %v53 = vsel %vm51, %v24, 0
    %v56 = vsel %vm51, %v25, 0
    %v59 = vsel %vm51, %v26, 0
    %v62 = vsel %vm51, %v27, 0
    %v65 = vsel %vm51, %v28, 0
    %v68 = vsel %vm51, %v29, 0
    %v71 = vsel %vm51, %v30, 0
    %v74 = vsel %vm51, %v31, 0
    %v77 = vsel %vm51, %v32, 0
    %v80 = vsel %vm51, %v33, 0
    %v83 = vsel %vm51, %v34, 0
    %v86 = vsel %vm51, %v35, 0
    %v89 = vsel %vm51, %v36, 0
    %v92 = vsel %vm51, %v37, 0
    %v95 = vsel %vm51, %v38, 0
    %v98 = vsel %vm51, %v39, 0
    %100 = vmatprep.subr.mxu0 0.0
    %101 = vmatpush1.msra.mxu0 0.0
    %102 = vmatprep.subr.mxu0 0.0
    %103 = vmatpush1.msra.mxu0 0.0
    %104 = vmatprep.subr.mxu0 0.0
    %105 = vmatpush1.msra.mxu0 0.0
    %106 = vmatprep.subr.mxu0 0.0
    %107 = vmatpush1.msra.mxu0 0.0
    %108 = vmatprep.subr.mxu0 0.0
    %109 = vmatpush1.msra.mxu0 0.0
    %110 = vmatprep.subr.mxu0 0.0
    %111 = vmatpush1.msra.mxu0 0.0
    %112 = vmatprep.subr.mxu0 0.0
    %113 = vmatpush1.msra.mxu0 0.0
    %114 = vmatprep.subr.mxu0 0.0
    %115 = vmatpush1.msra.mxu0 0.0
    %116 = vmatprep.subr.mxu0 0.0
    %117 = vmatpush1.msra.mxu0 0.0
    %118 = vmatprep.subr.mxu0 0.0
    %119 = vmatpush1.msra.mxu0 0.0
    %120 = vmatprep.subr.mxu0 0.0
    %121 = vmatpush1.msra.mxu0 0.0
    %122 = vmatprep.subr.mxu0 0.0
    %123 = vmatpush1.msra.mxu0 0.0
    %124 = vmatprep.subr.mxu0 0.0
    %125 = vmatpush1.msra.mxu0 %v43
    %126 = vmatprep.subr.mxu0 0.0
    %127 = vmatpush1.msra.mxu0 %v42
    %128 = vmatprep.subr.mxu0 0.0
    %129 = vmatpush1.msra.mxu0 %v41
    %130 = vmatprep.subr.mxu0 0.0
    %131 = vmatpush1.msra.mxu0 %v40
    %132 = vmatprep.subr.mxu0 0.0
    %133 = vmatpush2.msra.mxu0 0.0
    %134 = vmatprep.subr.mxu0 0.0
    %135 = vmatpush2.msra.mxu0 0.0
    %136 = vmatprep.subr.mxu0 0.0
    %137 = vmatpush2.msra.mxu0 0.0
    %138 = vmatprep.subr.mxu0 0.0
    %139 = vmatpush2.msra.mxu0 0.0
    %140 = vmatprep.subr.mxu0 0.0
    %141 = vmatpush2.msra.mxu0 0.0
    %142 = vmatprep.subr.mxu0 0.0
    %143 = vmatpush2.msra.mxu0 0.0
    %144 = vmatprep.subr.mxu0 0.0
    %145 = vmatpush2.msra.mxu0 0.0
    %146 = vmatprep.subr.mxu0 0.0
    %147 = vmatpush2.msra.mxu0 0.0
    %148 = vmatprep.subr.mxu0 0.0
    %149 = vmatpush2.msra.mxu0 0.0
    %150 = vmatprep.subr.mxu0 0.0
    %151 = vmatpush2.msra.mxu0 0.0
    %152 = vmatprep.subr.mxu0 0.0
    %153 = vmatpush2.msra.mxu0 0.0
    %154 = vmatprep.subr.mxu0 0.0
    %155 = vmatpush2.msra.mxu0 0.0
    %156 = vmatprep.subr.mxu0 0.0
    %157 = vmatpush2.msra.mxu0 0.0
    %158 = vmatprep.subr.mxu0 0.0
    %159 = vmatpush2.msra.mxu0 0.0
    %160 = vmatprep.subr.mxu0 0.0
    %161 = vmatpush2.msra.mxu0 0.0
    %162 = vmatprep.subr.mxu0 0.0
    %163 = vmatpush2.msra.mxu0 0.0
    %164 = vmatprep.mubr.f32.mxu0 0.0
    %165 = vmatmul.mubr.f32.gmra.mxu0 %v53
    %v166 = vpop.f32.mrf.mxu0
    %v167 = vadd.f32 %v49, %v166
    %v168 = vpop.f32.mrf.mxu0
    %169 = vmatprep.mubr.f32.mxu0 0.0
    %170 = vmatmul.mubr.f32.gmra.mxu0 %v56
    %v171 = vpop.f32.mrf.mxu0
    %v172 = vadd.f32 %v49, %v171
    %v173 = vpop.f32.mrf.mxu0
    %174 = vmatprep.mubr.f32.mxu0 0.0
    %175 = vmatmul.mubr.f32.gmra.mxu0 %v59
    %v176 = vpop.f32.mrf.mxu0
    %v177 = vadd.f32 %v49, %v176
    %v178 = vpop.f32.mrf.mxu0
    %179 = vmatprep.mubr.f32.mxu0 0.0
    %180 = vmatmul.mubr.f32.gmra.mxu0 %v62
    %v181 = vpop.f32.mrf.mxu0
    %v182 = vadd.f32 %v49, %v181
    %v183 = vpop.f32.mrf.mxu0
    %184 = vmatprep.mubr.f32.mxu0 0.0
    %185 = vmatmul.mubr.f32.gmra.mxu0 %v65
    %v186 = vpop.f32.mrf.mxu0
    %v187 = vadd.f32 %v49, %v186
    %v188 = vpop.f32.mrf.mxu0
    %189 = vmatprep.mubr.f32.mxu0 0.0
    %190 = vmatmul.mubr.f32.gmra.mxu0 %v68
    %v191 = vpop.f32.mrf.mxu0
    %v192 = vadd.f32 %v49, %v191
    %v193 = vpop.f32.mrf.mxu0
    %194 = vmatprep.mubr.f32.mxu0 0.0
    %195 = vmatmul.mubr.f32.gmra.mxu0 %v71
    %v196 = vpop.f32.mrf.mxu0
    %v197 = vadd.f32 %v49, %v196
    %v198 = vpop.f32.mrf.mxu0
    %199 = vmatprep.mubr.f32.mxu0 0.0
    %200 = vmatmul.mubr.f32.gmra.mxu0 %v74
    %v201 = vpop.f32.mrf.mxu0
    %v202 = vadd.f32 %v49, %v201
    %v203 = vpop.f32.mrf.mxu0
    %204 = vmatprep.mubr.f32.mxu0 0.0
    %205 = vmatmul.mubr.f32.gmra.mxu0 %v77
    %v206 = vpop.f32.mrf.mxu0
    %v207 = vadd.f32 %v49, %v206
    %v208 = vpop.f32.mrf.mxu0
    %209 = vmatprep.mubr.f32.mxu0 0.0
    %210 = vmatmul.mubr.f32.gmra.mxu0 %v80
    %v211 = vpop.f32.mrf.mxu0
    %v212 = vadd.f32 %v49, %v211
    %v213 = vpop.f32.mrf.mxu0
    %214 = vmatprep.mubr.f32.mxu0 0.0
    %215 = vmatmul.mubr.f32.gmra.mxu0 %v83
    %v216 = vpop.f32.mrf.mxu0
    %v217 = vadd.f32 %v49, %v216
    %v218 = vpop.f32.mrf.mxu0
    %219 = vmatprep.mubr.f32.mxu0 0.0
    %220 = vmatmul.mubr.f32.gmra.mxu0 %v86
    %v221 = vpop.f32.mrf.mxu0
    %v222 = vadd.f32 %v49, %v221
    %v223 = vpop.f32.mrf.mxu0
    %224 = vmatprep.mubr.f32.mxu0 0.0
    %225 = vmatmul.mubr.f32.gmra.mxu0 %v89
    %v226 = vpop.f32.mrf.mxu0
    %v227 = vadd.f32 %v49, %v226
    %v228 = vpop.f32.mrf.mxu0
    %229 = vmatprep.mubr.f32.mxu0 0.0
    %230 = vmatmul.mubr.f32.gmra.mxu0 %v92
    %v231 = vpop.f32.mrf.mxu0
    %v232 = vadd.f32 %v49, %v231
    %v233 = vpop.f32.mrf.mxu0
    %234 = vmatprep.mubr.f32.mxu0 0.0
    %235 = vmatmul.mubr.f32.gmra.mxu0 %v95
    %v236 = vpop.f32.mrf.mxu0
    %v237 = vadd.f32 %v49, %v236
    %v238 = vpop.f32.mrf.mxu0
    %239 = vmatprep.mubr.f32.mxu0 0.0
    %240 = vmatmul.mubr.f32.gmra.mxu0 %v98
    %v241 = vpop.f32.mrf.mxu0
    %v242 = vadd.f32 %v49, %v241
    %v243 = vpop.f32.mrf.mxu0
    %244 = vdwg.mxu0
    %v245 = vmul.f32 %v167, 0.25
    %v246 = vmul.f32 %v172, 0.25
    %v247 = vmul.f32 %v177, 0.25
    %v248 = vmul.f32 %v182, 0.25
    %v249 = vmul.f32 %v187, 0.25
    %v250 = vmul.f32 %v192, 0.25
    %v251 = vmul.f32 %v197, 0.25
    %v252 = vmul.f32 %v202, 0.25
    %v253 = vmul.f32 %v207, 0.25
    %v254 = vmul.f32 %v212, 0.25
    %v255 = vmul.f32 %v217, 0.25
    %v256 = vmul.f32 %v222, 0.25
    %v257 = vmul.f32 %v227, 0.25
    %v258 = vmul.f32 %v232, 0.25
    %v259 = vmul.f32 %v237, 0.25
    %v260 = vmul.f32 %v242, 0.25
    %v261 = vld [vmem:[%s5] sm:$0xff]
    %v262 = vld [vmem:[%s5 + $0x8] sm:$0xff]
    %v263 = vld [vmem:[%s5 + $0x10] sm:$0xff]
    %v264 = vld [vmem:[%s5 + $0x18] sm:$0xff]
    %v265 = vld [vmem:[%s5 + $0x20] sm:$0xff]
    %v266 = vld [vmem:[%s5 + $0x28] sm:$0xff]
    %v267 = vld [vmem:[%s5 + $0x30] sm:$0xff]
    %v268 = vld [vmem:[%s5 + $0x38] sm:$0xff]
    %v269 = vld [vmem:[%s5 + $0x40] sm:$0xff]
    %v270 = vld [vmem:[%s5 + $0x48] sm:$0xff]
    %v271 = vld [vmem:[%s5 + $0x50] sm:$0xff]
    %v272 = vld [vmem:[%s5 + $0x58] sm:$0xff]
    %v273 = vld [vmem:[%s5 + $0x60] sm:$0xff]
    %v274 = vld [vmem:[%s5 + $0x68] sm:$0xff]
    %v275 = vld [vmem:[%s5 + $0x70] sm:$0xff]
    %v276 = vld [vmem:[%s5 + $0x78] sm:$0xff]
    %293 = vrot.lane.b32.xlu0 %v167, 96
    %v294 = vpop.permute.xlu0 %293
    %295 = vrot.lane.b32.xlu0 %v172, 96
    %v296 = vpop.permute.xlu0 %295
    %297 = vrot.lane.b32.xlu0 %v177, 96
    %v298 = vpop.permute.xlu0 %297
    %299 = vrot.lane.b32.xlu0 %v182, 96
    %v300 = vpop.permute.xlu0 %299
    %301 = vrot.lane.b32.xlu0 %v187, 96
    %v302 = vpop.permute.xlu0 %301
    %303 = vrot.lane.b32.xlu0 %v192, 96
    %v304 = vpop.permute.xlu0 %303
    %305 = vrot.lane.b32.xlu0 %v197, 96
    %v306 = vpop.permute.xlu0 %305
    %307 = vrot.lane.b32.xlu0 %v202, 96
    %v308 = vpop.permute.xlu0 %307
    %309 = vrot.lane.b32.xlu0 %v207, 96
    %v310 = vpop.permute.xlu0 %309
    %311 = vrot.lane.b32.xlu0 %v212, 96
    %v312 = vpop.permute.xlu0 %311
    %313 = vrot.lane.b32.xlu0 %v217, 96
    %v314 = vpop.permute.xlu0 %313
    %315 = vrot.lane.b32.xlu0 %v222, 96
    %v316 = vpop.permute.xlu0 %315
    %317 = vrot.lane.b32.xlu0 %v227, 96
    %v318 = vpop.permute.xlu0 %317
    %319 = vrot.lane.b32.xlu0 %v232, 96
    %v320 = vpop.permute.xlu0 %319
    %321 = vrot.lane.b32.xlu0 %v237, 96
    %v322 = vpop.permute.xlu0 %321
    %323 = vrot.lane.b32.xlu0 %v242, 96
    %v324 = vpop.permute.xlu0 %323
    %vm325 = vcmask 130048
    %v327 = vsel %vm325, %v245, 0
    %v330 = vsel %vm325, %v246, 0
    %v333 = vsel %vm325, %v247, 0
    %v336 = vsel %vm325, %v248, 0
    %v339 = vsel %vm325, %v249, 0
    %v342 = vsel %vm325, %v250, 0
    %v345 = vsel %vm325, %v251, 0
    %v348 = vsel %vm325, %v252, 0
    %v351 = vsel %vm325, %v253, 0
    %v354 = vsel %vm325, %v254, 0
    %v357 = vsel %vm325, %v255, 0
    %v360 = vsel %vm325, %v256, 0
    %v363 = vsel %vm325, %v257, 0
    %v366 = vsel %vm325, %v258, 0
    %v369 = vsel %vm325, %v259, 0
    %v372 = vsel %vm325, %v260, 0
    %v374 = vsel %vm325, %v294, 0
    %v376 = vsel %vm325, %v296, 0
    %v378 = vsel %vm325, %v298, 0
    %v380 = vsel %vm325, %v300, 0
    %v382 = vsel %vm325, %v302, 0
    %v384 = vsel %vm325, %v304, 0
    %v386 = vsel %vm325, %v306, 0
    %v388 = vsel %vm325, %v308, 0
    %v390 = vsel %vm325, %v310, 0
    %v392 = vsel %vm325, %v312, 0
    %v394 = vsel %vm325, %v314, 0
    %v396 = vsel %vm325, %v316, 0
    %v398 = vsel %vm325, %v318, 0
    %v400 = vsel %vm325, %v320, 0
    %v402 = vsel %vm325, %v322, 0
    %v404 = vsel %vm325, %v324, 0
    %406 = vmatprep.subr.mxu0 0.0
    %407 = vmatpush1.xpose.msra.mxu0 %v404
    %408 = vmatprep.subr.mxu0 0.0
    %409 = vmatpush1.xpose.msra.mxu0 %v402
    %410 = vmatprep.subr.mxu0 0.0
    %411 = vmatpush1.xpose.msra.mxu0 %v400
    %412 = vmatprep.subr.mxu0 0.0
    %413 = vmatpush1.xpose.msra.mxu0 %v398
    %414 = vmatprep.subr.mxu0 0.0
    %415 = vmatpush1.xpose.msra.mxu0 %v396
    %416 = vmatprep.subr.mxu0 0.0
    %417 = vmatpush1.xpose.msra.mxu0 %v394
    %418 = vmatprep.subr.mxu0 0.0
    %419 = vmatpush1.xpose.msra.mxu0 %v392
    %420 = vmatprep.subr.mxu0 0.0
    %421 = vmatpush1.xpose.msra.mxu0 %v390
    %422 = vmatprep.subr.mxu0 0.0
    %423 = vmatpush1.xpose.msra.mxu0 %v388
    %424 = vmatprep.subr.mxu0 0.0
    %425 = vmatpush1.xpose.msra.mxu0 %v386
    %426 = vmatprep.subr.mxu0 0.0
    %427 = vmatpush1.xpose.msra.mxu0 %v384
    %428 = vmatprep.subr.mxu0 0.0
    %429 = vmatpush1.xpose.msra.mxu0 %v382
    %430 = vmatprep.subr.mxu0 0.0
    %431 = vmatpush1.xpose.msra.mxu0 %v380
    %432 = vmatprep.subr.mxu0 0.0
    %433 = vmatpush1.xpose.msra.mxu0 %v378
    %434 = vmatprep.subr.mxu0 0.0
    %435 = vmatpush1.xpose.msra.mxu0 %v376
    %436 = vmatprep.subr.mxu0 0.0
    %437 = vmatpush1.xpose.msra.mxu0 %v374
    %438 = vmatprep.subr.mxu0 0.0
    %439 = vmatpush2.xpose.msra.mxu0 0.0
    %440 = vmatprep.subr.mxu0 0.0
    %441 = vmatpush2.xpose.msra.mxu0 0.0
    %442 = vmatprep.subr.mxu0 0.0
    %443 = vmatpush2.xpose.msra.mxu0 0.0
    %444 = vmatprep.subr.mxu0 0.0
    %445 = vmatpush2.xpose.msra.mxu0 0.0
    %446 = vmatprep.subr.mxu0 0.0
    %447 = vmatpush2.xpose.msra.mxu0 0.0
    %448 = vmatprep.subr.mxu0 0.0
    %449 = vmatpush2.xpose.msra.mxu0 0.0
    %450 = vmatprep.subr.mxu0 0.0
    %451 = vmatpush2.xpose.msra.mxu0 0.0
    %452 = vmatprep.subr.mxu0 0.0
    %453 = vmatpush2.xpose.msra.mxu0 0.0
    %454 = vmatprep.subr.mxu0 0.0
    %455 = vmatpush2.xpose.msra.mxu0 0.0
    %456 = vmatprep.subr.mxu0 0.0
    %457 = vmatpush2.xpose.msra.mxu0 0.0
    %458 = vmatprep.subr.mxu0 0.0
    %459 = vmatpush2.xpose.msra.mxu0 0.0
    %460 = vmatprep.subr.mxu0 0.0
    %461 = vmatpush2.xpose.msra.mxu0 0.0
    %462 = vmatprep.subr.mxu0 0.0
    %463 = vmatpush2.xpose.msra.mxu0 0.0
    %464 = vmatprep.subr.mxu0 0.0
    %465 = vmatpush2.xpose.msra.mxu0 0.0
    %466 = vmatprep.subr.mxu0 0.0
    %467 = vmatpush2.xpose.msra.mxu0 0.0
    %468 = vmatprep.subr.mxu0 0.0
    %469 = vmatpush2.xpose.msra.mxu0 0.0
    %470 = vmatprep.mubr.f32.mxu0 0.0
    %471 = vmatmul.mubr.f32.gmra.mxu0 %v327
    %v472 = vpop.f32.mrf.mxu0
    %v473 = vadd.f32 %v261, %v472
    %v474 = vpop.f32.mrf.mxu0
    %475 = vmatprep.mubr.f32.mxu0 0.0
    %476 = vmatmul.mubr.f32.gmra.mxu0 %v330
    %v477 = vpop.f32.mrf.mxu0
    %v478 = vadd.f32 %v262, %v477
    %v479 = vpop.f32.mrf.mxu0
    %480 = vmatprep.mubr.f32.mxu0 0.0
    %481 = vmatmul.mubr.f32.gmra.mxu0 %v333
    %v482 = vpop.f32.mrf.mxu0
    %v483 = vadd.f32 %v263, %v482
    %v484 = vpop.f32.mrf.mxu0
    %485 = vmatprep.mubr.f32.mxu0 0.0
    %486 = vmatmul.mubr.f32.gmra.mxu0 %v336
    %v487 = vpop.f32.mrf.mxu0
    %v488 = vadd.f32 %v264, %v487
    %v489 = vpop.f32.mrf.mxu0
    %490 = vmatprep.mubr.f32.mxu0 0.0
    %491 = vmatmul.mubr.f32.gmra.mxu0 %v339
    %v492 = vpop.f32.mrf.mxu0
    %v493 = vadd.f32 %v265, %v492
    %v494 = vpop.f32.mrf.mxu0
    %495 = vmatprep.mubr.f32.mxu0 0.0
    %496 = vmatmul.mubr.f32.gmra.mxu0 %v342
    %v497 = vpop.f32.mrf.mxu0
    %v498 = vadd.f32 %v266, %v497
    %v499 = vpop.f32.mrf.mxu0
    %500 = vmatprep.mubr.f32.mxu0 0.0
    %501 = vmatmul.mubr.f32.gmra.mxu0 %v345
    %v502 = vpop.f32.mrf.mxu0
    %v503 = vadd.f32 %v267, %v502
    %v504 = vpop.f32.mrf.mxu0
    %505 = vmatprep.mubr.f32.mxu0 0.0
    %506 = vmatmul.mubr.f32.gmra.mxu0 %v348
    %v507 = vpop.f32.mrf.mxu0
    %v508 = vadd.f32 %v268, %v507
    %v509 = vpop.f32.mrf.mxu0
    %510 = vmatprep.mubr.f32.mxu0 0.0
    %511 = vmatmul.mubr.f32.gmra.mxu0 %v351
    %v512 = vpop.f32.mrf.mxu0
    %v513 = vadd.f32 %v269, %v512
    %v514 = vpop.f32.mrf.mxu0
    %515 = vmatprep.mubr.f32.mxu0 0.0
    %516 = vmatmul.mubr.f32.gmra.mxu0 %v354
    %v517 = vpop.f32.mrf.mxu0
    %v518 = vadd.f32 %v270, %v517
    %v519 = vpop.f32.mrf.mxu0
    %520 = vmatprep.mubr.f32.mxu0 0.0
    %521 = vmatmul.mubr.f32.gmra.mxu0 %v357
    %v522 = vpop.f32.mrf.mxu0
    %v523 = vadd.f32 %v271, %v522
    %v524 = vpop.f32.mrf.mxu0
    %525 = vmatprep.mubr.f32.mxu0 0.0
    %526 = vmatmul.mubr.f32.gmra.mxu0 %v360
    %v527 = vpop.f32.mrf.mxu0
    %v528 = vadd.f32 %v272, %v527
    %v529 = vpop.f32.mrf.mxu0
    %530 = vmatprep.mubr.f32.mxu0 0.0
    %531 = vmatmul.mubr.f32.gmra.mxu0 %v363
    %v532 = vpop.f32.mrf.mxu0
    %v533 = vadd.f32 %v273, %v532
    %v534 = vpop.f32.mrf.mxu0
    %535 = vmatprep.mubr.f32.mxu0 0.0
    %536 = vmatmul.mubr.f32.gmra.mxu0 %v366
    %v537 = vpop.f32.mrf.mxu0
    %v538 = vadd.f32 %v274, %v537
    %v539 = vpop.f32.mrf.mxu0
    %540 = vmatprep.mubr.f32.mxu0 0.0
    %541 = vmatmul.mubr.f32.gmra.mxu0 %v369
    %v542 = vpop.f32.mrf.mxu0
    %v543 = vadd.f32 %v275, %v542
    %v544 = vpop.f32.mrf.mxu0
    %545 = vmatprep.mubr.f32.mxu0 0.0
    %546 = vmatmul.mubr.f32.gmra.mxu0 %v372
    %v547 = vpop.f32.mrf.mxu0
    %v548 = vadd.f32 %v276, %v547
    %v549 = vpop.f32.mrf.mxu0
    %550 = vdwg.mxu0
    %551 = vmax.xlane.f32.xlu0 %v473
    %v552 = vpop.xlane.xlu0 %551
    %553 = vmax.xlane.f32.xlu0 %v478
    %v554 = vpop.xlane.xlu0 %553
    %555 = vmax.xlane.f32.xlu0 %v483
    %v556 = vpop.xlane.xlu0 %555
    %557 = vmax.xlane.f32.xlu0 %v488
    %v558 = vpop.xlane.xlu0 %557
    %559 = vmax.xlane.f32.xlu0 %v493
    %v560 = vpop.xlane.xlu0 %559
    %561 = vmax.xlane.f32.xlu0 %v498
    %v562 = vpop.xlane.xlu0 %561
    %563 = vmax.xlane.f32.xlu0 %v503
    %v564 = vpop.xlane.xlu0 %563
    %565 = vmax.xlane.f32.xlu0 %v508
    %v566 = vpop.xlane.xlu0 %565
    %567 = vmax.xlane.f32.xlu0 %v513
    %v568 = vpop.xlane.xlu0 %567
    %569 = vmax.xlane.f32.xlu0 %v518
    %v570 = vpop.xlane.xlu0 %569
    %571 = vmax.xlane.f32.xlu0 %v523
    %v572 = vpop.xlane.xlu0 %571
    %573 = vmax.xlane.f32.xlu0 %v528
    %v574 = vpop.xlane.xlu0 %573
    %575 = vmax.xlane.f32.xlu0 %v533
    %v576 = vpop.xlane.xlu0 %575
    %577 = vmax.xlane.f32.xlu0 %v538
    %v578 = vpop.xlane.xlu0 %577
    %579 = vmax.xlane.f32.xlu0 %v543
    %v580 = vpop.xlane.xlu0 %579
    %581 = vmax.xlane.f32.xlu0 %v548
    %v582 = vpop.xlane.xlu0 %581
    %v583 = vsub.f32 %v473, %v552
    %v584 = vsub.f32 %v478, %v554
    %v585 = vsub.f32 %v483, %v556
    %v586 = vsub.f32 %v488, %v558
    %v587 = vsub.f32 %v493, %v560
    %v588 = vsub.f32 %v498, %v562
    %v589 = vsub.f32 %v503, %v564
    %v590 = vsub.f32 %v508, %v566
    %v591 = vsub.f32 %v513, %v568
    %v592 = vsub.f32 %v518, %v570
    %v593 = vsub.f32 %v523, %v572
    %v594 = vsub.f32 %v528, %v574
    %v595 = vsub.f32 %v533, %v576
    %v596 = vsub.f32 %v538, %v578
    %v597 = vsub.f32 %v543, %v580
    %v598 = vsub.f32 %v548, %v582
    %v599 = vmul.f32 %v583, 1.442695
    %v600 = vpow.pop %v599
    %v601 = vmul.f32 %v584, 1.442695
    %v602 = vpow.pop %v601
    %v603 = vmul.f32 %v585, 1.442695
    %v604 = vpow.pop %v603
    %v605 = vmul.f32 %v586, 1.442695
    %v606 = vpow.pop %v605
    %v607 = vmul.f32 %v587, 1.442695
    %v608 = vpow.pop %v607
    %v609 = vmul.f32 %v588, 1.442695
    %v610 = vpow.pop %v609
    %v611 = vmul.f32 %v589, 1.442695
    %v612 = vpow.pop %v611
    %v613 = vmul.f32 %v590, 1.442695
    %v614 = vpow.pop %v613
    %v615 = vmul.f32 %v591, 1.442695
    %v616 = vpow.pop %v615
    %v617 = vmul.f32 %v592, 1.442695
    %v618 = vpow.pop %v617
    %v619 = vmul.f32 %v593, 1.442695
    %v620 = vpow.pop %v619
    %v621 = vmul.f32 %v594, 1.442695
    %v622 = vpow.pop %v621
    %v623 = vmul.f32 %v595, 1.442695
    %v624 = vpow.pop %v623
    %v625 = vmul.f32 %v596, 1.442695
    %v626 = vpow.pop %v625
    %v627 = vmul.f32 %v597, 1.442695
    %v628 = vpow.pop %v627
    %v629 = vmul.f32 %v598, 1.442695
    %v630 = vpow.pop %v629
    %631 = vadd.xlane.f32.xlu0 %v600
    %v632 = vpop.xlane.xlu0 %631
    %633 = vadd.xlane.f32.xlu0 %v602
    %v634 = vpop.xlane.xlu0 %633
    %635 = vadd.xlane.f32.xlu0 %v604
    %v636 = vpop.xlane.xlu0 %635
    %637 = vadd.xlane.f32.xlu0 %v606
    %v638 = vpop.xlane.xlu0 %637
    %639 = vadd.xlane.f32.xlu0 %v608
    %v640 = vpop.xlane.xlu0 %639
    %641 = vadd.xlane.f32.xlu0 %v610
    %v642 = vpop.xlane.xlu0 %641
    %643 = vadd.xlane.f32.xlu0 %v612
    %v644 = vpop.xlane.xlu0 %643
    %645 = vadd.xlane.f32.xlu0 %v614
    %v646 = vpop.xlane.xlu0 %645
    %647 = vadd.xlane.f32.xlu0 %v616
    %v648 = vpop.xlane.xlu0 %647
    %649 = vadd.xlane.f32.xlu0 %v618
    %v650 = vpop.xlane.xlu0 %649
    %651 = vadd.xlane.f32.xlu0 %v620
    %v652 = vpop.xlane.xlu0 %651
    %653 = vadd.xlane.f32.xlu0 %v622
    %v654 = vpop.xlane.xlu0 %653
    %655 = vadd.xlane.f32.xlu0 %v624
    %v656 = vpop.xlane.xlu0 %655
    %657 = vadd.xlane.f32.xlu0 %v626
    %v658 = vpop.xlane.xlu0 %657
    %659 = vadd.xlane.f32.xlu0 %v628
    %v660 = vpop.xlane.xlu0 %659
    %661 = vadd.xlane.f32.xlu0 %v630
    %v662 = vpop.xlane.xlu0 %661
    %663 = vrot.lane.b32.xlu0 %v167, 64
    %v664 = vpop.permute.xlu0 %663
    %665 = vrot.lane.b32.xlu0 %v172, 64
    %v666 = vpop.permute.xlu0 %665
    %667 = vrot.lane.b32.xlu0 %v177, 64
    %v668 = vpop.permute.xlu0 %667
    %669 = vrot.lane.b32.xlu0 %v182, 64
    %v670 = vpop.permute.xlu0 %669
    %671 = vrot.lane.b32.xlu0 %v187, 64
    %v672 = vpop.permute.xlu0 %671
    %673 = vrot.lane.b32.xlu0 %v192, 64
    %v674 = vpop.permute.xlu0 %673
    %675 = vrot.lane.b32.xlu0 %v197, 64
    %v676 = vpop.permute.xlu0 %675
    %677 = vrot.lane.b32.xlu0 %v202, 64
    %v678 = vpop.permute.xlu0 %677
    %679 = vrot.lane.b32.xlu0 %v207, 64
    %v680 = vpop.permute.xlu0 %679
    %681 = vrot.lane.b32.xlu0 %v212, 64
    %v682 = vpop.permute.xlu0 %681
    %683 = vrot.lane.b32.xlu0 %v217, 64
    %v684 = vpop.permute.xlu0 %683
    %685 = vrot.lane.b32.xlu0 %v222, 64
    %v686 = vpop.permute.xlu0 %685
    %687 = vrot.lane.b32.xlu0 %v227, 64
    %v688 = vpop.permute.xlu0 %687
    %689 = vrot.lane.b32.xlu0 %v232, 64
    %v690 = vpop.permute.xlu0 %689
    %691 = vrot.lane.b32.xlu0 %v237, 64
    %v692 = vpop.permute.xlu0 %691
    %693 = vrot.lane.b32.xlu0 %v242, 64
    %v694 = vpop.permute.xlu0 %693
    %711 = vmatprep.subr.mxu0 0.0
    %712 = vmatpush1.msra.mxu0 %v694
    %713 = vmatprep.subr.mxu0 0.0
    %714 = vmatpush1.msra.mxu0 %v692
    %715 = vmatprep.subr.mxu0 0.0
    %716 = vmatpush1.msra.mxu0 %v690
    %717 = vmatprep.subr.mxu0 0.0
    %718 = vmatpush1.msra.mxu0 %v688
    %719 = vmatprep.subr.mxu0 0.0
    %720 = vmatpush1.msra.mxu0 %v686
    %721 = vmatprep.subr.mxu0 0.0
    %722 = vmatpush1.msra.mxu0 %v684
    %723 = vmatprep.subr.mxu0 0.0
    %724 = vmatpush1.msra.mxu0 %v682
    %725 = vmatprep.subr.mxu0 0.0
    %726 = vmatpush1.msra.mxu0 %v680
    %727 = vmatprep.subr.mxu0 0.0
    %728 = vmatpush1.msra.mxu0 %v678
    %729 = vmatprep.subr.mxu0 0.0
    %730 = vmatpush1.msra.mxu0 %v676
    %731 = vmatprep.subr.mxu0 0.0
    %732 = vmatpush1.msra.mxu0 %v674
    %733 = vmatprep.subr.mxu0 0.0
    %734 = vmatpush1.msra.mxu0 %v672
    %735 = vmatprep.subr.mxu0 0.0
    %736 = vmatpush1.msra.mxu0 %v670
    %737 = vmatprep.subr.mxu0 0.0
    %738 = vmatpush1.msra.mxu0 %v668
    %739 = vmatprep.subr.mxu0 0.0
    %740 = vmatpush1.msra.mxu0 %v666
    %741 = vmatprep.subr.mxu0 0.0
    %742 = vmatpush1.msra.mxu0 %v664
    %743 = vmatprep.subr.mxu0 0.0
    %744 = vmatpush2.msra.mxu0 0.0
    %745 = vmatprep.subr.mxu0 0.0
    %746 = vmatpush2.msra.mxu0 0.0
    %747 = vmatprep.subr.mxu0 0.0
    %748 = vmatpush2.msra.mxu0 0.0
    %749 = vmatprep.subr.mxu0 0.0
    %750 = vmatpush2.msra.mxu0 0.0
    %751 = vmatprep.subr.mxu0 0.0
    %752 = vmatpush2.msra.mxu0 0.0
    %753 = vmatprep.subr.mxu0 0.0
    %754 = vmatpush2.msra.mxu0 0.0
    %755 = vmatprep.subr.mxu0 0.0
    %756 = vmatpush2.msra.mxu0 0.0
    %757 = vmatprep.subr.mxu0 0.0
    %758 = vmatpush2.msra.mxu0 0.0
    %759 = vmatprep.subr.mxu0 0.0
    %760 = vmatpush2.msra.mxu0 0.0
    %761 = vmatprep.subr.mxu0 0.0
    %762 = vmatpush2.msra.mxu0 0.0
    %763 = vmatprep.subr.mxu0 0.0
    %764 = vmatpush2.msra.mxu0 0.0
    %765 = vmatprep.subr.mxu0 0.0
    %766 = vmatpush2.msra.mxu0 0.0
    %767 = vmatprep.subr.mxu0 0.0
    %768 = vmatpush2.msra.mxu0 0.0
    %769 = vmatprep.subr.mxu0 0.0
    %770 = vmatpush2.msra.mxu0 0.0
    %771 = vmatprep.subr.mxu0 0.0
    %772 = vmatpush2.msra.mxu0 0.0
    %773 = vmatprep.subr.mxu0 0.0
    %774 = vmatpush2.msra.mxu0 0.0
    %775 = vmatprep.mubr.f32.mxu0 0.0
    %776 = vmatmul.mubr.f32.gmra.mxu0 %v600
    %v777 = vpop.f32.mrf.mxu0
    %v778 = vadd.f32 0.0, %v777
    %v779 = vpop.f32.mrf.mxu0
    %780 = vmatprep.mubr.f32.mxu0 0.0
    %781 = vmatmul.mubr.f32.gmra.mxu0 %v602
    %v782 = vpop.f32.mrf.mxu0
    %v783 = vadd.f32 0.0, %v782
    %v784 = vpop.f32.mrf.mxu0
    %785 = vmatprep.mubr.f32.mxu0 0.0
    %786 = vmatmul.mubr.f32.gmra.mxu0 %v604
    %v787 = vpop.f32.mrf.mxu0
    %v788 = vadd.f32 0.0, %v787
    %v789 = vpop.f32.mrf.mxu0
    %790 = vmatprep.mubr.f32.mxu0 0.0
    %791 = vmatmul.mubr.f32.gmra.mxu0 %v606
    %v792 = vpop.f32.mrf.mxu0
    %v793 = vadd.f32 0.0, %v792
    %v794 = vpop.f32.mrf.mxu0
    %795 = vmatprep.mubr.f32.mxu0 0.0
    %796 = vmatmul.mubr.f32.gmra.mxu0 %v608
    %v797 = vpop.f32.mrf.mxu0
    %v798 = vadd.f32 0.0, %v797
    %v799 = vpop.f32.mrf.mxu0
    %800 = vmatprep.mubr.f32.mxu0 0.0
    %801 = vmatmul.mubr.f32.gmra.mxu0 %v610
    %v802 = vpop.f32.mrf.mxu0
    %v803 = vadd.f32 0.0, %v802
    %v804 = vpop.f32.mrf.mxu0
    %805 = vmatprep.mubr.f32.mxu0 0.0
    %806 = vmatmul.mubr.f32.gmra.mxu0 %v612
    %v807 = vpop.f32.mrf.mxu0
    %v808 = vadd.f32 0.0, %v807
    %v809 = vpop.f32.mrf.mxu0
    %810 = vmatprep.mubr.f32.mxu0 0.0
    %811 = vmatmul.mubr.f32.gmra.mxu0 %v614
    %v812 = vpop.f32.mrf.mxu0
    %v813 = vadd.f32 0.0, %v812
    %v814 = vpop.f32.mrf.mxu0
    %815 = vmatprep.mubr.f32.mxu0 0.0
    %816 = vmatmul.mubr.f32.gmra.mxu0 %v616
    %v817 = vpop.f32.mrf.mxu0
    %v818 = vadd.f32 0.0, %v817
    %v819 = vpop.f32.mrf.mxu0
    %820 = vmatprep.mubr.f32.mxu0 0.0
    %821 = vmatmul.mubr.f32.gmra.mxu0 %v618
    %v822 = vpop.f32.mrf.mxu0
    %v823 = vadd.f32 0.0, %v822
    %v824 = vpop.f32.mrf.mxu0
    %825 = vmatprep.mubr.f32.mxu0 0.0
    %826 = vmatmul.mubr.f32.gmra.mxu0 %v620
    %v827 = vpop.f32.mrf.mxu0
    %v828 = vadd.f32 0.0, %v827
    %v829 = vpop.f32.mrf.mxu0
    %830 = vmatprep.mubr.f32.mxu0 0.0
    %831 = vmatmul.mubr.f32.gmra.mxu0 %v622
    %v832 = vpop.f32.mrf.mxu0
    %v833 = vadd.f32 0.0, %v832
    %v834 = vpop.f32.mrf.mxu0
    %835 = vmatprep.mubr.f32.mxu0 0.0
    %836 = vmatmul.mubr.f32.gmra.mxu0 %v624
    %v837 = vpop.f32.mrf.mxu0
    %v838 = vadd.f32 0.0, %v837
    %v839 = vpop.f32.mrf.mxu0
    %840 = vmatprep.mubr.f32.mxu0 0.0
    %841 = vmatmul.mubr.f32.gmra.mxu0 %v626
    %v842 = vpop.f32.mrf.mxu0
    %v843 = vadd.f32 0.0, %v842
    %v844 = vpop.f32.mrf.mxu0
    %845 = vmatprep.mubr.f32.mxu0 0.0
    %846 = vmatmul.mubr.f32.gmra.mxu0 %v628
    %v847 = vpop.f32.mrf.mxu0
    %v848 = vadd.f32 0.0, %v847
    %v849 = vpop.f32.mrf.mxu0
    %850 = vmatprep.mubr.f32.mxu0 0.0
    %851 = vmatmul.mubr.f32.gmra.mxu0 %v630
    %v852 = vpop.f32.mrf.mxu0
    %v853 = vadd.f32 0.0, %v852
    %v854 = vpop.f32.mrf.mxu0
    %855 = vdwg.mxu0
    %v856 = vrcp.pop %v632
    %v857 = vrcp.pop %v634
    %v858 = vrcp.pop %v636
    %v859 = vrcp.pop %v638
    %v860 = vrcp.pop %v640
    %v861 = vrcp.pop %v642
    %v862 = vrcp.pop %v644
    %v863 = vrcp.pop %v646
    %v864 = vrcp.pop %v648
    %v865 = vrcp.pop %v650
    %v866 = vrcp.pop %v652
    %v867 = vrcp.pop %v654
    %v868 = vrcp.pop %v656
    %v869 = vrcp.pop %v658
    %v870 = vrcp.pop %v660
    %v871 = vrcp.pop %v662
    %v872 = vmul.f32 %v778, %v856
    %v873 = vmul.f32 %v783, %v857
    %v874 = vmul.f32 %v788, %v858
    %v875 = vmul.f32 %v793, %v859
    %v876 = vmul.f32 %v798, %v860
    %v877 = vmul.f32 %v803, %v861
    %v878 = vmul.f32 %v808, %v862
    %v879 = vmul.f32 %v813, %v863
    %v880 = vmul.f32 %v818, %v864
    %v881 = vmul.f32 %v823, %v865
    %v882 = vmul.f32 %v828, %v866
    %v883 = vmul.f32 %v833, %v867
    %v884 = vmul.f32 %v838, %v868
    %v885 = vmul.f32 %v843, %v869
    %v886 = vmul.f32 %v848, %v870
    %v887 = vmul.f32 %v853, %v871
    %s888 = scalar_lea.vmem %s5, 128
    %v889 = vld [vmem:[%s888] sm:$0xff]
    %v890 = vld [vmem:[%s888 + $0x8] sm:$0xff]
    %v891 = vld [vmem:[%s888 + $0x10] sm:$0xff]
    %v892 = vld [vmem:[%s888 + $0x18] sm:$0xff]
    %v893 = vld [vmem:[%s888 + $0x20] sm:$0xff]
    %v894 = vld [vmem:[%s888 + $0x28] sm:$0xff]
    %v895 = vld [vmem:[%s888 + $0x30] sm:$0xff]
    %v896 = vld [vmem:[%s888 + $0x38] sm:$0xff]
    %v897 = vld [vmem:[%s888 + $0x40] sm:$0xff]
    %v898 = vld [vmem:[%s888 + $0x48] sm:$0xff]
    %v899 = vld [vmem:[%s888 + $0x50] sm:$0xff]
    %v900 = vld [vmem:[%s888 + $0x58] sm:$0xff]
    %v901 = vld [vmem:[%s888 + $0x60] sm:$0xff]
    %v902 = vld [vmem:[%s888 + $0x68] sm:$0xff]
    %v903 = vld [vmem:[%s888 + $0x70] sm:$0xff]
    %v904 = vld [vmem:[%s888 + $0x78] sm:$0xff]
    %905 = vrot.lane.b32.xlu0 %v245, 112
    %v906 = vpop.permute.xlu0 %905
    %907 = vrot.lane.b32.xlu0 %v246, 112
    %v908 = vpop.permute.xlu0 %907
    %909 = vrot.lane.b32.xlu0 %v247, 112
    %v910 = vpop.permute.xlu0 %909
    %911 = vrot.lane.b32.xlu0 %v248, 112
    %v912 = vpop.permute.xlu0 %911
    %913 = vrot.lane.b32.xlu0 %v249, 112
    %v914 = vpop.permute.xlu0 %913
    %915 = vrot.lane.b32.xlu0 %v250, 112
    %v916 = vpop.permute.xlu0 %915
    %917 = vrot.lane.b32.xlu0 %v251, 112
    %v918 = vpop.permute.xlu0 %917
    %919 = vrot.lane.b32.xlu0 %v252, 112
    %v920 = vpop.permute.xlu0 %919
    %921 = vrot.lane.b32.xlu0 %v253, 112
    %v922 = vpop.permute.xlu0 %921
    %923 = vrot.lane.b32.xlu0 %v254, 112
    %v924 = vpop.permute.xlu0 %923
    %925 = vrot.lane.b32.xlu0 %v255, 112
    %v926 = vpop.permute.xlu0 %925
    %927 = vrot.lane.b32.xlu0 %v256, 112
    %v928 = vpop.permute.xlu0 %927
    %929 = vrot.lane.b32.xlu0 %v257, 112
    %v930 = vpop.permute.xlu0 %929
    %931 = vrot.lane.b32.xlu0 %v258, 112
    %v932 = vpop.permute.xlu0 %931
    %933 = vrot.lane.b32.xlu0 %v259, 112
    %v934 = vpop.permute.xlu0 %933
    %935 = vrot.lane.b32.xlu0 %v260, 112
    %v936 = vpop.permute.xlu0 %935
    %937 = vrot.lane.b32.xlu0 %v167, 80
    %v938 = vpop.permute.xlu0 %937
    %939 = vrot.lane.b32.xlu0 %v172, 80
    %v940 = vpop.permute.xlu0 %939
    %941 = vrot.lane.b32.xlu0 %v177, 80
    %v942 = vpop.permute.xlu0 %941
    %943 = vrot.lane.b32.xlu0 %v182, 80
    %v944 = vpop.permute.xlu0 %943
    %945 = vrot.lane.b32.xlu0 %v187, 80
    %v946 = vpop.permute.xlu0 %945
    %947 = vrot.lane.b32.xlu0 %v192, 80
    %v948 = vpop.permute.xlu0 %947
    %949 = vrot.lane.b32.xlu0 %v197, 80
    %v950 = vpop.permute.xlu0 %949
    %951 = vrot.lane.b32.xlu0 %v202, 80
    %v952 = vpop.permute.xlu0 %951
    %953 = vrot.lane.b32.xlu0 %v207, 80
    %v954 = vpop.permute.xlu0 %953
    %955 = vrot.lane.b32.xlu0 %v212, 80
    %v956 = vpop.permute.xlu0 %955
    %957 = vrot.lane.b32.xlu0 %v217, 80
    %v958 = vpop.permute.xlu0 %957
    %959 = vrot.lane.b32.xlu0 %v222, 80
    %v960 = vpop.permute.xlu0 %959
    %961 = vrot.lane.b32.xlu0 %v227, 80
    %v962 = vpop.permute.xlu0 %961
    %963 = vrot.lane.b32.xlu0 %v232, 80
    %v964 = vpop.permute.xlu0 %963
    %965 = vrot.lane.b32.xlu0 %v237, 80
    %v966 = vpop.permute.xlu0 %965
    %967 = vrot.lane.b32.xlu0 %v242, 80
    %v968 = vpop.permute.xlu0 %967
    %v969 = vsel %vm325, %v906, 0
    %v971 = vsel %vm325, %v908, 0
    %v973 = vsel %vm325, %v910, 0
    %v975 = vsel %vm325, %v912, 0
    %v977 = vsel %vm325, %v914, 0
    %v979 = vsel %vm325, %v916, 0
    %v981 = vsel %vm325, %v918, 0
    %v983 = vsel %vm325, %v920, 0
    %v985 = vsel %vm325, %v922, 0
    %v987 = vsel %vm325, %v924, 0
    %v989 = vsel %vm325, %v926, 0
    %v991 = vsel %vm325, %v928, 0
    %v993 = vsel %vm325, %v930, 0
    %v995 = vsel %vm325, %v932, 0
    %v997 = vsel %vm325, %v934, 0
    %v999 = vsel %vm325, %v936, 0
    %v1001 = vsel %vm325, %v938, 0
    %v1003 = vsel %vm325, %v940, 0
    %v1005 = vsel %vm325, %v942, 0
    %v1007 = vsel %vm325, %v944, 0
    %v1009 = vsel %vm325, %v946, 0
    %v1011 = vsel %vm325, %v948, 0
    %v1013 = vsel %vm325, %v950, 0
    %v1015 = vsel %vm325, %v952, 0
    %v1017 = vsel %vm325, %v954, 0
    %v1019 = vsel %vm325, %v956, 0
    %v1021 = vsel %vm325, %v958, 0
    %v1023 = vsel %vm325, %v960, 0
    %v1025 = vsel %vm325, %v962, 0
    %v1027 = vsel %vm325, %v964, 0
    %v1029 = vsel %vm325, %v966, 0
    %v1031 = vsel %vm325, %v968, 0
    %1033 = vmatprep.subr.mxu0 0.0
    %1034 = vmatpush1.xpose.msra.mxu0 %v1031
    %1035 = vmatprep.subr.mxu0 0.0
    %1036 = vmatpush1.xpose.msra.mxu0 %v1029
    %1037 = vmatprep.subr.mxu0 0.0
    %1038 = vmatpush1.xpose.msra.mxu0 %v1027
    %1039 = vmatprep.subr.mxu0 0.0
    %1040 = vmatpush1.xpose.msra.mxu0 %v1025
    %1041 = vmatprep.subr.mxu0 0.0
    %1042 = vmatpush1.xpose.msra.mxu0 %v1023
    %1043 = vmatprep.subr.mxu0 0.0
    %1044 = vmatpush1.xpose.msra.mxu0 %v1021
    %1045 = vmatprep.subr.mxu0 0.0
    %1046 = vmatpush1.xpose.msra.mxu0 %v1019
    %1047 = vmatprep.subr.mxu0 0.0
    %1048 = vmatpush1.xpose.msra.mxu0 %v1017
    %1049 = vmatprep.subr.mxu0 0.0
    %1050 = vmatpush1.xpose.msra.mxu0 %v1015
    %1051 = vmatprep.subr.mxu0 0.0
    %1052 = vmatpush1.xpose.msra.mxu0 %v1013
    %1053 = vmatprep.subr.mxu0 0.0
    %1054 = vmatpush1.xpose.msra.mxu0 %v1011
    %1055 = vmatprep.subr.mxu0 0.0
    %1056 = vmatpush1.xpose.msra.mxu0 %v1009
    %1057 = vmatprep.subr.mxu0 0.0
    %1058 = vmatpush1.xpose.msra.mxu0 %v1007
    %1059 = vmatprep.subr.mxu0 0.0
    %1060 = vmatpush1.xpose.msra.mxu0 %v1005
    %1061 = vmatprep.subr.mxu0 0.0
    %1062 = vmatpush1.xpose.msra.mxu0 %v1003
    %1063 = vmatprep.subr.mxu0 0.0
    %1064 = vmatpush1.xpose.msra.mxu0 %v1001
    %1065 = vmatprep.subr.mxu0 0.0
    %1066 = vmatpush2.xpose.msra.mxu0 0.0
    %1067 = vmatprep.subr.mxu0 0.0
    %1068 = vmatpush2.xpose.msra.mxu0 0.0
    %1069 = vmatprep.subr.mxu0 0.0
    %1070 = vmatpush2.xpose.msra.mxu0 0.0
    %1071 = vmatprep.subr.mxu0 0.0
    %1072 = vmatpush2.xpose.msra.mxu0 0.0
    %1073 = vmatprep.subr.mxu0 0.0
    %1074 = vmatpush2.xpose.msra.mxu0 0.0
    %1075 = vmatprep.subr.mxu0 0.0
    %1076 = vmatpush2.xpose.msra.mxu0 0.0
    %1077 = vmatprep.subr.mxu0 0.0
    %1078 = vmatpush2.xpose.msra.mxu0 0.0
    %1079 = vmatprep.subr.mxu0 0.0
    %1080 = vmatpush2.xpose.msra.mxu0 0.0
    %1081 = vmatprep.subr.mxu0 0.0
    %1082 = vmatpush2.xpose.msra.mxu0 0.0
    %1083 = vmatprep.subr.mxu0 0.0
    %1084 = vmatpush2.xpose.msra.mxu0 0.0
    %1085 = vmatprep.subr.mxu0 0.0
    %1086 = vmatpush2.xpose.msra.mxu0 0.0
    %1087 = vmatprep.subr.mxu0 0.0
    %1088 = vmatpush2.xpose.msra.mxu0 0.0
    %1089 = vmatprep.subr.mxu0 0.0
    %1090 = vmatpush2.xpose.msra.mxu0 0.0
    %1091 = vmatprep.subr.mxu0 0.0
    %1092 = vmatpush2.xpose.msra.mxu0 0.0
    %1093 = vmatprep.subr.mxu0 0.0
    %1094 = vmatpush2.xpose.msra.mxu0 0.0
    %1095 = vmatprep.subr.mxu0 0.0
    %1096 = vmatpush2.xpose.msra.mxu0 0.0
    %1097 = vmatprep.mubr.f32.mxu0 0.0
    %1098 = vmatmul.mubr.f32.gmra.mxu0 %v969
    %v1099 = vpop.f32.mrf.mxu0
    %v1100 = vadd.f32 %v889, %v1099
    %v1101 = vpop.f32.mrf.mxu0
    %1102 = vmatprep.mubr.f32.mxu0 0.0
    %1103 = vmatmul.mubr.f32.gmra.mxu0 %v971
    %v1104 = vpop.f32.mrf.mxu0
    %v1105 = vadd.f32 %v890, %v1104
    %v1106 = vpop.f32.mrf.mxu0
    %1107 = vmatprep.mubr.f32.mxu0 0.0
    %1108 = vmatmul.mubr.f32.gmra.mxu0 %v973
    %v1109 = vpop.f32.mrf.mxu0
    %v1110 = vadd.f32 %v891, %v1109
    %v1111 = vpop.f32.mrf.mxu0
    %1112 = vmatprep.mubr.f32.mxu0 0.0
    %1113 = vmatmul.mubr.f32.gmra.mxu0 %v975
    %v1114 = vpop.f32.mrf.mxu0
    %v1115 = vadd.f32 %v892, %v1114
    %v1116 = vpop.f32.mrf.mxu0
    %1117 = vmatprep.mubr.f32.mxu0 0.0
    %1118 = vmatmul.mubr.f32.gmra.mxu0 %v977
    %v1119 = vpop.f32.mrf.mxu0
    %v1120 = vadd.f32 %v893, %v1119
    %v1121 = vpop.f32.mrf.mxu0
    %1122 = vmatprep.mubr.f32.mxu0 0.0
    %1123 = vmatmul.mubr.f32.gmra.mxu0 %v979
    %v1124 = vpop.f32.mrf.mxu0
    %v1125 = vadd.f32 %v894, %v1124
    %v1126 = vpop.f32.mrf.mxu0
    %1127 = vmatprep.mubr.f32.mxu0 0.0
    %1128 = vmatmul.mubr.f32.gmra.mxu0 %v981
    %v1129 = vpop.f32.mrf.mxu0
    %v1130 = vadd.f32 %v895, %v1129
    %v1131 = vpop.f32.mrf.mxu0
    %1132 = vmatprep.mubr.f32.mxu0 0.0
    %1133 = vmatmul.mubr.f32.gmra.mxu0 %v983
    %v1134 = vpop.f32.mrf.mxu0
    %v1135 = vadd.f32 %v896, %v1134
    %v1136 = vpop.f32.mrf.mxu0
    %1137 = vmatprep.mubr.f32.mxu0 0.0
    %1138 = vmatmul.mubr.f32.gmra.mxu0 %v985
    %v1139 = vpop.f32.mrf.mxu0
    %v1140 = vadd.f32 %v897, %v1139
    %v1141 = vpop.f32.mrf.mxu0
    %1142 = vmatprep.mubr.f32.mxu0 0.0
    %1143 = vmatmul.mubr.f32.gmra.mxu0 %v987
    %v1144 = vpop.f32.mrf.mxu0
    %v1145 = vadd.f32 %v898, %v1144
    %v1146 = vpop.f32.mrf.mxu0
    %1147 = vmatprep.mubr.f32.mxu0 0.0
    %1148 = vmatmul.mubr.f32.gmra.mxu0 %v989
    %v1149 = vpop.f32.mrf.mxu0
    %v1150 = vadd.f32 %v899, %v1149
    %v1151 = vpop.f32.mrf.mxu0
    %1152 = vmatprep.mubr.f32.mxu0 0.0
    %1153 = vmatmul.mubr.f32.gmra.mxu0 %v991
    %v1154 = vpop.f32.mrf.mxu0
    %v1155 = vadd.f32 %v900, %v1154
    %v1156 = vpop.f32.mrf.mxu0
    %1157 = vmatprep.mubr.f32.mxu0 0.0
    %1158 = vmatmul.mubr.f32.gmra.mxu0 %v993
    %v1159 = vpop.f32.mrf.mxu0
    %v1160 = vadd.f32 %v901, %v1159
    %v1161 = vpop.f32.mrf.mxu0
    %1162 = vmatprep.mubr.f32.mxu0 0.0
    %1163 = vmatmul.mubr.f32.gmra.mxu0 %v995
    %v1164 = vpop.f32.mrf.mxu0
    %v1165 = vadd.f32 %v902, %v1164
    %v1166 = vpop.f32.mrf.mxu0
    %1167 = vmatprep.mubr.f32.mxu0 0.0
    %1168 = vmatmul.mubr.f32.gmra.mxu0 %v997
    %v1169 = vpop.f32.mrf.mxu0
    %v1170 = vadd.f32 %v903, %v1169
    %v1171 = vpop.f32.mrf.mxu0
    %1172 = vmatprep.mubr.f32.mxu0 0.0
    %1173 = vmatmul.mubr.f32.gmra.mxu0 %v999
    %v1174 = vpop.f32.mrf.mxu0
    %v1175 = vadd.f32 %v904, %v1174
    %v1176 = vpop.f32.mrf.mxu0
    %1177 = vdwg.mxu0
    %1178 = vmax.xlane.f32.xlu0 %v1100
    %v1179 = vpop.xlane.xlu0 %1178
    %1180 = vmax.xlane.f32.xlu0 %v1105
    %v1181 = vpop.xlane.xlu0 %1180
    %1182 = vmax.xlane.f32.xlu0 %v1110
    %v1183 = vpop.xlane.xlu0 %1182
    %1184 = vmax.xlane.f32.xlu0 %v1115
    %v1185 = vpop.xlane.xlu0 %1184
    %1186 = vmax.xlane.f32.xlu0 %v1120
    %v1187 = vpop.xlane.xlu0 %1186
    %1188 = vmax.xlane.f32.xlu0 %v1125
    %v1189 = vpop.xlane.xlu0 %1188
    %1190 = vmax.xlane.f32.xlu0 %v1130
    %v1191 = vpop.xlane.xlu0 %1190
    %1192 = vmax.xlane.f32.xlu0 %v1135
    %v1193 = vpop.xlane.xlu0 %1192
    %1194 = vmax.xlane.f32.xlu0 %v1140
    %v1195 = vpop.xlane.xlu0 %1194
    %1196 = vmax.xlane.f32.xlu0 %v1145
    %v1197 = vpop.xlane.xlu0 %1196
    %1198 = vmax.xlane.f32.xlu0 %v1150
    %v1199 = vpop.xlane.xlu0 %1198
    %1200 = vmax.xlane.f32.xlu0 %v1155
    %v1201 = vpop.xlane.xlu0 %1200
    %1202 = vmax.xlane.f32.xlu0 %v1160
    %v1203 = vpop.xlane.xlu0 %1202
    %1204 = vmax.xlane.f32.xlu0 %v1165
    %v1205 = vpop.xlane.xlu0 %1204
    %1206 = vmax.xlane.f32.xlu0 %v1170
    %v1207 = vpop.xlane.xlu0 %1206
    %1208 = vmax.xlane.f32.xlu0 %v1175
    %v1209 = vpop.xlane.xlu0 %1208
    %v1210 = vsub.f32 %v1100, %v1179
    %v1211 = vsub.f32 %v1105, %v1181
    %v1212 = vsub.f32 %v1110, %v1183
    %v1213 = vsub.f32 %v1115, %v1185
    %v1214 = vsub.f32 %v1120, %v1187
    %v1215 = vsub.f32 %v1125, %v1189
    %v1216 = vsub.f32 %v1130, %v1191
    %v1217 = vsub.f32 %v1135, %v1193
    %v1218 = vsub.f32 %v1140, %v1195
    %v1219 = vsub.f32 %v1145, %v1197
    %v1220 = vsub.f32 %v1150, %v1199
    %v1221 = vsub.f32 %v1155, %v1201
    %v1222 = vsub.f32 %v1160, %v1203
    %v1223 = vsub.f32 %v1165, %v1205
    %v1224 = vsub.f32 %v1170, %v1207
    %v1225 = vsub.f32 %v1175, %v1209
    %v1226 = vmul.f32 %v1210, 1.442695
    %v1227 = vpow.pop %v1226
    %v1228 = vmul.f32 %v1211, 1.442695
    %v1229 = vpow.pop %v1228
    %v1230 = vmul.f32 %v1212, 1.442695
    %v1231 = vpow.pop %v1230
    %v1232 = vmul.f32 %v1213, 1.442695
    %v1233 = vpow.pop %v1232
    %v1234 = vmul.f32 %v1214, 1.442695
    %v1235 = vpow.pop %v1234
    %v1236 = vmul.f32 %v1215, 1.442695
    %v1237 = vpow.pop %v1236
    %v1238 = vmul.f32 %v1216, 1.442695
    %v1239 = vpow.pop %v1238
    %v1240 = vmul.f32 %v1217, 1.442695
    %v1241 = vpow.pop %v1240
    %v1242 = vmul.f32 %v1218, 1.442695
    %v1243 = vpow.pop %v1242
    %v1244 = vmul.f32 %v1219, 1.442695
    %v1245 = vpow.pop %v1244
    %v1246 = vmul.f32 %v1220, 1.442695
    %v1247 = vpow.pop %v1246
    %v1248 = vmul.f32 %v1221, 1.442695
    %v1249 = vpow.pop %v1248
    %v1250 = vmul.f32 %v1222, 1.442695
    %v1251 = vpow.pop %v1250
    %v1252 = vmul.f32 %v1223, 1.442695
    %v1253 = vpow.pop %v1252
    %v1254 = vmul.f32 %v1224, 1.442695
    %v1255 = vpow.pop %v1254
    %v1256 = vmul.f32 %v1225, 1.442695
    %v1257 = vpow.pop %v1256
    %1258 = vadd.xlane.f32.xlu0 %v1227
    %v1259 = vpop.xlane.xlu0 %1258
    %1260 = vadd.xlane.f32.xlu0 %v1229
    %v1261 = vpop.xlane.xlu0 %1260
    %1262 = vadd.xlane.f32.xlu0 %v1231
    %v1263 = vpop.xlane.xlu0 %1262
    %1264 = vadd.xlane.f32.xlu0 %v1233
    %v1265 = vpop.xlane.xlu0 %1264
    %1266 = vadd.xlane.f32.xlu0 %v1235
    %v1267 = vpop.xlane.xlu0 %1266
    %1268 = vadd.xlane.f32.xlu0 %v1237
    %v1269 = vpop.xlane.xlu0 %1268
    %1270 = vadd.xlane.f32.xlu0 %v1239
    %v1271 = vpop.xlane.xlu0 %1270
    %1272 = vadd.xlane.f32.xlu0 %v1241
    %v1273 = vpop.xlane.xlu0 %1272
    %1274 = vadd.xlane.f32.xlu0 %v1243
    %v1275 = vpop.xlane.xlu0 %1274
    %1276 = vadd.xlane.f32.xlu0 %v1245
    %v1277 = vpop.xlane.xlu0 %1276
    %1278 = vadd.xlane.f32.xlu0 %v1247
    %v1279 = vpop.xlane.xlu0 %1278
    %1280 = vadd.xlane.f32.xlu0 %v1249
    %v1281 = vpop.xlane.xlu0 %1280
    %1282 = vadd.xlane.f32.xlu0 %v1251
    %v1283 = vpop.xlane.xlu0 %1282
    %1284 = vadd.xlane.f32.xlu0 %v1253
    %v1285 = vpop.xlane.xlu0 %1284
    %1286 = vadd.xlane.f32.xlu0 %v1255
    %v1287 = vpop.xlane.xlu0 %1286
    %1288 = vadd.xlane.f32.xlu0 %v1257
    %v1289 = vpop.xlane.xlu0 %1288
    %1290 = vrot.lane.b32.xlu0 %v167, 48
    %v1291 = vpop.permute.xlu0 %1290
    %1292 = vrot.lane.b32.xlu0 %v172, 48
    %v1293 = vpop.permute.xlu0 %1292
    %1294 = vrot.lane.b32.xlu0 %v177, 48
    %v1295 = vpop.permute.xlu0 %1294
    %1296 = vrot.lane.b32.xlu0 %v182, 48
    %v1297 = vpop.permute.xlu0 %1296
    %1298 = vrot.lane.b32.xlu0 %v187, 48
    %v1299 = vpop.permute.xlu0 %1298
    %1300 = vrot.lane.b32.xlu0 %v192, 48
    %v1301 = vpop.permute.xlu0 %1300
    %1302 = vrot.lane.b32.xlu0 %v197, 48
    %v1303 = vpop.permute.xlu0 %1302
    %1304 = vrot.lane.b32.xlu0 %v202, 48
    %v1305 = vpop.permute.xlu0 %1304
    %1306 = vrot.lane.b32.xlu0 %v207, 48
    %v1307 = vpop.permute.xlu0 %1306
    %1308 = vrot.lane.b32.xlu0 %v212, 48
    %v1309 = vpop.permute.xlu0 %1308
    %1310 = vrot.lane.b32.xlu0 %v217, 48
    %v1311 = vpop.permute.xlu0 %1310
    %1312 = vrot.lane.b32.xlu0 %v222, 48
    %v1313 = vpop.permute.xlu0 %1312
    %1314 = vrot.lane.b32.xlu0 %v227, 48
    %v1315 = vpop.permute.xlu0 %1314
    %1316 = vrot.lane.b32.xlu0 %v232, 48
    %v1317 = vpop.permute.xlu0 %1316
    %1318 = vrot.lane.b32.xlu0 %v237, 48
    %v1319 = vpop.permute.xlu0 %1318
    %1320 = vrot.lane.b32.xlu0 %v242, 48
    %v1321 = vpop.permute.xlu0 %1320
    %1338 = vmatprep.subr.mxu0 0.0
    %1339 = vmatpush1.msra.mxu0 %v1321
    %1340 = vmatprep.subr.mxu0 0.0
    %1341 = vmatpush1.msra.mxu0 %v1319
    %1342 = vmatprep.subr.mxu0 0.0
    %1343 = vmatpush1.msra.mxu0 %v1317
    %1344 = vmatprep.subr.mxu0 0.0
    %1345 = vmatpush1.msra.mxu0 %v1315
    %1346 = vmatprep.subr.mxu0 0.0
    %1347 = vmatpush1.msra.mxu0 %v1313
    %1348 = vmatprep.subr.mxu0 0.0
    %1349 = vmatpush1.msra.mxu0 %v1311
    %1350 = vmatprep.subr.mxu0 0.0
    %1351 = vmatpush1.msra.mxu0 %v1309
    %1352 = vmatprep.subr.mxu0 0.0
    %1353 = vmatpush1.msra.mxu0 %v1307
    %1354 = vmatprep.subr.mxu0 0.0
    %1355 = vmatpush1.msra.mxu0 %v1305
    %1356 = vmatprep.subr.mxu0 0.0
    %1357 = vmatpush1.msra.mxu0 %v1303
    %1358 = vmatprep.subr.mxu0 0.0
    %1359 = vmatpush1.msra.mxu0 %v1301
    %1360 = vmatprep.subr.mxu0 0.0
    %1361 = vmatpush1.msra.mxu0 %v1299
    %1362 = vmatprep.subr.mxu0 0.0
    %1363 = vmatpush1.msra.mxu0 %v1297
    %1364 = vmatprep.subr.mxu0 0.0
    %1365 = vmatpush1.msra.mxu0 %v1295
    %1366 = vmatprep.subr.mxu0 0.0
    %1367 = vmatpush1.msra.mxu0 %v1293
    %1368 = vmatprep.subr.mxu0 0.0
    %1369 = vmatpush1.msra.mxu0 %v1291
    %1370 = vmatprep.subr.mxu0 0.0
    %1371 = vmatpush2.msra.mxu0 0.0
    %1372 = vmatprep.subr.mxu0 0.0
    %1373 = vmatpush2.msra.mxu0 0.0
    %1374 = vmatprep.subr.mxu0 0.0
    %1375 = vmatpush2.msra.mxu0 0.0
    %1376 = vmatprep.subr.mxu0 0.0
    %1377 = vmatpush2.msra.mxu0 0.0
    %1378 = vmatprep.subr.mxu0 0.0
    %1379 = vmatpush2.msra.mxu0 0.0
    %1380 = vmatprep.subr.mxu0 0.0
    %1381 = vmatpush2.msra.mxu0 0.0
    %1382 = vmatprep.subr.mxu0 0.0
    %1383 = vmatpush2.msra.mxu0 0.0
    %1384 = vmatprep.subr.mxu0 0.0
    %1385 = vmatpush2.msra.mxu0 0.0
    %1386 = vmatprep.subr.mxu0 0.0
    %1387 = vmatpush2.msra.mxu0 0.0
    %1388 = vmatprep.subr.mxu0 0.0
    %1389 = vmatpush2.msra.mxu0 0.0
    %1390 = vmatprep.subr.mxu0 0.0
    %1391 = vmatpush2.msra.mxu0 0.0
    %1392 = vmatprep.subr.mxu0 0.0
    %1393 = vmatpush2.msra.mxu0 0.0
    %1394 = vmatprep.subr.mxu0 0.0
    %1395 = vmatpush2.msra.mxu0 0.0
    %1396 = vmatprep.subr.mxu0 0.0
    %1397 = vmatpush2.msra.mxu0 0.0
    %1398 = vmatprep.subr.mxu0 0.0
    %1399 = vmatpush2.msra.mxu0 0.0
    %1400 = vmatprep.subr.mxu0 0.0
    %1401 = vmatpush2.msra.mxu0 0.0
    %1402 = vmatprep.mubr.f32.mxu0 0.0
    %1403 = vmatmul.mubr.f32.gmra.mxu0 %v1227
    %v1404 = vpop.f32.mrf.mxu0
    %v1405 = vadd.f32 0.0, %v1404
    %v1406 = vpop.f32.mrf.mxu0
    %1407 = vmatprep.mubr.f32.mxu0 0.0
    %1408 = vmatmul.mubr.f32.gmra.mxu0 %v1229
    %v1409 = vpop.f32.mrf.mxu0
    %v1410 = vadd.f32 0.0, %v1409
    %v1411 = vpop.f32.mrf.mxu0
    %1412 = vmatprep.mubr.f32.mxu0 0.0
    %1413 = vmatmul.mubr.f32.gmra.mxu0 %v1231
    %v1414 = vpop.f32.mrf.mxu0
    %v1415 = vadd.f32 0.0, %v1414
    %v1416 = vpop.f32.mrf.mxu0
    %1417 = vmatprep.mubr.f32.mxu0 0.0
    %1418 = vmatmul.mubr.f32.gmra.mxu0 %v1233
    %v1419 = vpop.f32.mrf.mxu0
    %v1420 = vadd.f32 0.0, %v1419
    %v1421 = vpop.f32.mrf.mxu0
    %1422 = vmatprep.mubr.f32.mxu0 0.0
    %1423 = vmatmul.mubr.f32.gmra.mxu0 %v1235
    %v1424 = vpop.f32.mrf.mxu0
    %v1425 = vadd.f32 0.0, %v1424
    %v1426 = vpop.f32.mrf.mxu0
    %1427 = vmatprep.mubr.f32.mxu0 0.0
    %1428 = vmatmul.mubr.f32.gmra.mxu0 %v1237
    %v1429 = vpop.f32.mrf.mxu0
    %v1430 = vadd.f32 0.0, %v1429
    %v1431 = vpop.f32.mrf.mxu0
    %1432 = vmatprep.mubr.f32.mxu0 0.0
    %1433 = vmatmul.mubr.f32.gmra.mxu0 %v1239
    %v1434 = vpop.f32.mrf.mxu0
    %v1435 = vadd.f32 0.0, %v1434
    %v1436 = vpop.f32.mrf.mxu0
    %1437 = vmatprep.mubr.f32.mxu0 0.0
    %1438 = vmatmul.mubr.f32.gmra.mxu0 %v1241
    %v1439 = vpop.f32.mrf.mxu0
    %v1440 = vadd.f32 0.0, %v1439
    %v1441 = vpop.f32.mrf.mxu0
    %1442 = vmatprep.mubr.f32.mxu0 0.0
    %1443 = vmatmul.mubr.f32.gmra.mxu0 %v1243
    %v1444 = vpop.f32.mrf.mxu0
    %v1445 = vadd.f32 0.0, %v1444
    %v1446 = vpop.f32.mrf.mxu0
    %1447 = vmatprep.mubr.f32.mxu0 0.0
    %1448 = vmatmul.mubr.f32.gmra.mxu0 %v1245
    %v1449 = vpop.f32.mrf.mxu0
    %v1450 = vadd.f32 0.0, %v1449
    %v1451 = vpop.f32.mrf.mxu0
    %1452 = vmatprep.mubr.f32.mxu0 0.0
    %1453 = vmatmul.mubr.f32.gmra.mxu0 %v1247
    %v1454 = vpop.f32.mrf.mxu0
    %v1455 = vadd.f32 0.0, %v1454
    %v1456 = vpop.f32.mrf.mxu0
    %1457 = vmatprep.mubr.f32.mxu0 0.0
    %1458 = vmatmul.mubr.f32.gmra.mxu0 %v1249
    %v1459 = vpop.f32.mrf.mxu0
    %v1460 = vadd.f32 0.0, %v1459
    %v1461 = vpop.f32.mrf.mxu0
    %1462 = vmatprep.mubr.f32.mxu0 0.0
    %1463 = vmatmul.mubr.f32.gmra.mxu0 %v1251
    %v1464 = vpop.f32.mrf.mxu0
    %v1465 = vadd.f32 0.0, %v1464
    %v1466 = vpop.f32.mrf.mxu0
    %1467 = vmatprep.mubr.f32.mxu0 0.0
    %1468 = vmatmul.mubr.f32.gmra.mxu0 %v1253
    %v1469 = vpop.f32.mrf.mxu0
    %v1470 = vadd.f32 0.0, %v1469
    %v1471 = vpop.f32.mrf.mxu0
    %1472 = vmatprep.mubr.f32.mxu0 0.0
    %1473 = vmatmul.mubr.f32.gmra.mxu0 %v1255
    %v1474 = vpop.f32.mrf.mxu0
    %v1475 = vadd.f32 0.0, %v1474
    %v1476 = vpop.f32.mrf.mxu0
    %1477 = vmatprep.mubr.f32.mxu0 0.0
    %1478 = vmatmul.mubr.f32.gmra.mxu0 %v1257
    %v1479 = vpop.f32.mrf.mxu0
    %v1480 = vadd.f32 0.0, %v1479
    %v1481 = vpop.f32.mrf.mxu0
    %1482 = vdwg.mxu0
    %v1483 = vrcp.pop %v1259
    %v1484 = vrcp.pop %v1261
    %v1485 = vrcp.pop %v1263
    %v1486 = vrcp.pop %v1265
    %v1487 = vrcp.pop %v1267
    %v1488 = vrcp.pop %v1269
    %v1489 = vrcp.pop %v1271
    %v1490 = vrcp.pop %v1273
    %v1491 = vrcp.pop %v1275
    %v1492 = vrcp.pop %v1277
    %v1493 = vrcp.pop %v1279
    %v1494 = vrcp.pop %v1281
    %v1495 = vrcp.pop %v1283
    %v1496 = vrcp.pop %v1285
    %v1497 = vrcp.pop %v1287
    %v1498 = vrcp.pop %v1289
    %v1499 = vmul.f32 %v1405, %v1483
    %v1500 = vmul.f32 %v1410, %v1484
    %v1501 = vmul.f32 %v1415, %v1485
    %v1502 = vmul.f32 %v1420, %v1486
    %v1503 = vmul.f32 %v1425, %v1487
    %v1504 = vmul.f32 %v1430, %v1488
    %v1505 = vmul.f32 %v1435, %v1489
    %v1506 = vmul.f32 %v1440, %v1490
    %v1507 = vmul.f32 %v1445, %v1491
    %v1508 = vmul.f32 %v1450, %v1492
    %v1509 = vmul.f32 %v1455, %v1493
    %v1510 = vmul.f32 %v1460, %v1494
    %v1511 = vmul.f32 %v1465, %v1495
    %v1512 = vmul.f32 %v1470, %v1496
    %v1513 = vmul.f32 %v1475, %v1497
    %v1514 = vmul.f32 %v1480, %v1498
    %1531 = vrot.lane.b32.xlu0 %v1499, 16
    %v1532 = vpop.permute.xlu0 %1531
    %1533 = vrot.lane.b32.xlu0 %v1500, 16
    %v1534 = vpop.permute.xlu0 %1533
    %1535 = vrot.lane.b32.xlu0 %v1501, 16
    %v1536 = vpop.permute.xlu0 %1535
    %1537 = vrot.lane.b32.xlu0 %v1502, 16
    %v1538 = vpop.permute.xlu0 %1537
    %1539 = vrot.lane.b32.xlu0 %v1503, 16
    %v1540 = vpop.permute.xlu0 %1539
    %1541 = vrot.lane.b32.xlu0 %v1504, 16
    %v1542 = vpop.permute.xlu0 %1541
    %1543 = vrot.lane.b32.xlu0 %v1505, 16
    %v1544 = vpop.permute.xlu0 %1543
    %1545 = vrot.lane.b32.xlu0 %v1506, 16
    %v1546 = vpop.permute.xlu0 %1545
    %1547 = vrot.lane.b32.xlu0 %v1507, 16
    %v1548 = vpop.permute.xlu0 %1547
    %1549 = vrot.lane.b32.xlu0 %v1508, 16
    %v1550 = vpop.permute.xlu0 %1549
    %1551 = vrot.lane.b32.xlu0 %v1509, 16
    %v1552 = vpop.permute.xlu0 %1551
    %1553 = vrot.lane.b32.xlu0 %v1510, 16
    %v1554 = vpop.permute.xlu0 %1553
    %1555 = vrot.lane.b32.xlu0 %v1511, 16
    %v1556 = vpop.permute.xlu0 %1555
    %1557 = vrot.lane.b32.xlu0 %v1512, 16
    %v1558 = vpop.permute.xlu0 %1557
    %1559 = vrot.lane.b32.xlu0 %v1513, 16
    %v1560 = vpop.permute.xlu0 %1559
    %1561 = vrot.lane.b32.xlu0 %v1514, 16
    %v1562 = vpop.permute.xlu0 %1561
    %v1579 = vsel %vm325, %v872, %v1532
    %v1580 = vsel %vm325, %v873, %v1534
    %v1581 = vsel %vm325, %v874, %v1536
    %v1582 = vsel %vm325, %v875, %v1538
    %v1583 = vsel %vm325, %v876, %v1540
    %v1584 = vsel %vm325, %v877, %v1542
    %v1585 = vsel %vm325, %v878, %v1544
    %v1586 = vsel %vm325, %v879, %v1546
    %v1587 = vsel %vm325, %v880, %v1548
    %v1588 = vsel %vm325, %v881, %v1550
    %v1589 = vsel %vm325, %v882, %v1552
    %v1590 = vsel %vm325, %v883, %v1554
    %v1591 = vsel %vm325, %v884, %v1556
    %v1592 = vsel %vm325, %v885, %v1558
    %v1593 = vsel %vm325, %v886, %v1560
    %v1594 = vsel %vm325, %v887, %v1562
    %v1595 = vld [vmem:[%s3] sm:$0xff]
    %v1596 = vld [vmem:[%s3 + $0x8] sm:$0xff]
    %v1597 = vld [vmem:[%s3 + $0x10] sm:$0xff]
    %v1598 = vld [vmem:[%s3 + $0x18] sm:$0xff]
    %v1599 = vld [vmem:[%s4] sm:$0x1]
    %v1601 = vlaneseq
    %v1602 = vshrl.u32 %v1601, 7
    %v1603 = vsub.s32 0, %v1602
    %v1604 = vrot.slane %v1599, %v1603
    %v1607 = vsel %vm51, %v1579, 0
    %v1610 = vsel %vm51, %v1580, 0
    %v1613 = vsel %vm51, %v1581, 0
    %v1616 = vsel %vm51, %v1582, 0
    %v1619 = vsel %vm51, %v1583, 0
    %v1622 = vsel %vm51, %v1584, 0
    %v1625 = vsel %vm51, %v1585, 0
    %v1628 = vsel %vm51, %v1586, 0
    %v1631 = vsel %vm51, %v1587, 0
    %v1634 = vsel %vm51, %v1588, 0
    %v1637 = vsel %vm51, %v1589, 0
    %v1640 = vsel %vm51, %v1590, 0
    %v1643 = vsel %vm51, %v1591, 0
    %v1646 = vsel %vm51, %v1592, 0
    %v1649 = vsel %vm51, %v1593, 0
    %v1652 = vsel %vm51, %v1594, 0
    %1654 = vmatprep.subr.mxu0 0.0
    %1655 = vmatpush1.msra.mxu0 0.0
    %1656 = vmatprep.subr.mxu0 0.0
    %1657 = vmatpush1.msra.mxu0 0.0
    %1658 = vmatprep.subr.mxu0 0.0
    %1659 = vmatpush1.msra.mxu0 0.0
    %1660 = vmatprep.subr.mxu0 0.0
    %1661 = vmatpush1.msra.mxu0 0.0
    %1662 = vmatprep.subr.mxu0 0.0
    %1663 = vmatpush1.msra.mxu0 0.0
    %1664 = vmatprep.subr.mxu0 0.0
    %1665 = vmatpush1.msra.mxu0 0.0
    %1666 = vmatprep.subr.mxu0 0.0
    %1667 = vmatpush1.msra.mxu0 0.0
    %1668 = vmatprep.subr.mxu0 0.0
    %1669 = vmatpush1.msra.mxu0 0.0
    %1670 = vmatprep.subr.mxu0 0.0
    %1671 = vmatpush1.msra.mxu0 0.0
    %1672 = vmatprep.subr.mxu0 0.0
    %1673 = vmatpush1.msra.mxu0 0.0
    %1674 = vmatprep.subr.mxu0 0.0
    %1675 = vmatpush1.msra.mxu0 0.0
    %1676 = vmatprep.subr.mxu0 0.0
    %1677 = vmatpush1.msra.mxu0 0.0
    %1678 = vmatprep.subr.mxu0 0.0
    %1679 = vmatpush1.msra.mxu0 %v1598
    %1680 = vmatprep.subr.mxu0 0.0
    %1681 = vmatpush1.msra.mxu0 %v1597
    %1682 = vmatprep.subr.mxu0 0.0
    %1683 = vmatpush1.msra.mxu0 %v1596
    %1684 = vmatprep.subr.mxu0 0.0
    %1685 = vmatpush1.msra.mxu0 %v1595
    %1686 = vmatprep.subr.mxu0 0.0
    %1687 = vmatpush2.msra.mxu0 0.0
    %1688 = vmatprep.subr.mxu0 0.0
    %1689 = vmatpush2.msra.mxu0 0.0
    %1690 = vmatprep.subr.mxu0 0.0
    %1691 = vmatpush2.msra.mxu0 0.0
    %1692 = vmatprep.subr.mxu0 0.0
    %1693 = vmatpush2.msra.mxu0 0.0
    %1694 = vmatprep.subr.mxu0 0.0
    %1695 = vmatpush2.msra.mxu0 0.0
    %1696 = vmatprep.subr.mxu0 0.0
    %1697 = vmatpush2.msra.mxu0 0.0
    %1698 = vmatprep.subr.mxu0 0.0
    %1699 = vmatpush2.msra.mxu0 0.0
    %1700 = vmatprep.subr.mxu0 0.0
    %1701 = vmatpush2.msra.mxu0 0.0
    %1702 = vmatprep.subr.mxu0 0.0
    %1703 = vmatpush2.msra.mxu0 0.0
    %1704 = vmatprep.subr.mxu0 0.0
    %1705 = vmatpush2.msra.mxu0 0.0
    %1706 = vmatprep.subr.mxu0 0.0
    %1707 = vmatpush2.msra.mxu0 0.0
    %1708 = vmatprep.subr.mxu0 0.0
    %1709 = vmatpush2.msra.mxu0 0.0
    %1710 = vmatprep.subr.mxu0 0.0
    %1711 = vmatpush2.msra.mxu0 0.0
    %1712 = vmatprep.subr.mxu0 0.0
    %1713 = vmatpush2.msra.mxu0 0.0
    %1714 = vmatprep.subr.mxu0 0.0
    %1715 = vmatpush2.msra.mxu0 0.0
    %1716 = vmatprep.subr.mxu0 0.0
    %1717 = vmatpush2.msra.mxu0 0.0
    %1718 = vmatprep.mubr.f32.mxu0 0.0
    %1719 = vmatmul.mubr.f32.gmra.mxu0 %v1607
    %v1720 = vpop.f32.mrf.mxu0
    %v1721 = vadd.f32 %v1604, %v1720
    %v1722 = vpop.f32.mrf.mxu0
    %1723 = vmatprep.mubr.f32.mxu0 0.0
    %1724 = vmatmul.mubr.f32.gmra.mxu0 %v1610
    %v1725 = vpop.f32.mrf.mxu0
    %v1726 = vadd.f32 %v1604, %v1725
    %v1727 = vpop.f32.mrf.mxu0
    %1728 = vmatprep.mubr.f32.mxu0 0.0
    %1729 = vmatmul.mubr.f32.gmra.mxu0 %v1613
    %v1730 = vpop.f32.mrf.mxu0
    %v1731 = vadd.f32 %v1604, %v1730
    %v1732 = vpop.f32.mrf.mxu0
    %1733 = vmatprep.mubr.f32.mxu0 0.0
    %1734 = vmatmul.mubr.f32.gmra.mxu0 %v1616
    %v1735 = vpop.f32.mrf.mxu0
    %v1736 = vadd.f32 %v1604, %v1735
    %v1737 = vpop.f32.mrf.mxu0
    %1738 = vmatprep.mubr.f32.mxu0 0.0
    %1739 = vmatmul.mubr.f32.gmra.mxu0 %v1619
    %v1740 = vpop.f32.mrf.mxu0
    %v1741 = vadd.f32 %v1604, %v1740
    %v1742 = vpop.f32.mrf.mxu0
    %1743 = vmatprep.mubr.f32.mxu0 0.0
    %1744 = vmatmul.mubr.f32.gmra.mxu0 %v1622
    %v1745 = vpop.f32.mrf.mxu0
    %v1746 = vadd.f32 %v1604, %v1745
    %v1747 = vpop.f32.mrf.mxu0
    %1748 = vmatprep.mubr.f32.mxu0 0.0
    %1749 = vmatmul.mubr.f32.gmra.mxu0 %v1625
    %v1750 = vpop.f32.mrf.mxu0
    %v1751 = vadd.f32 %v1604, %v1750
    %v1752 = vpop.f32.mrf.mxu0
    %1753 = vmatprep.mubr.f32.mxu0 0.0
    %1754 = vmatmul.mubr.f32.gmra.mxu0 %v1628
    %v1755 = vpop.f32.mrf.mxu0
    %v1756 = vadd.f32 %v1604, %v1755
    %v1757 = vpop.f32.mrf.mxu0
    %1758 = vmatprep.mubr.f32.mxu0 0.0
    %1759 = vmatmul.mubr.f32.gmra.mxu0 %v1631
    %v1760 = vpop.f32.mrf.mxu0
    %v1761 = vadd.f32 %v1604, %v1760
    %v1762 = vpop.f32.mrf.mxu0
    %1763 = vmatprep.mubr.f32.mxu0 0.0
    %1764 = vmatmul.mubr.f32.gmra.mxu0 %v1634
    %v1765 = vpop.f32.mrf.mxu0
    %v1766 = vadd.f32 %v1604, %v1765
    %v1767 = vpop.f32.mrf.mxu0
    %1768 = vmatprep.mubr.f32.mxu0 0.0
    %1769 = vmatmul.mubr.f32.gmra.mxu0 %v1637
    %v1770 = vpop.f32.mrf.mxu0
    %v1771 = vadd.f32 %v1604, %v1770
    %v1772 = vpop.f32.mrf.mxu0
    %1773 = vmatprep.mubr.f32.mxu0 0.0
    %1774 = vmatmul.mubr.f32.gmra.mxu0 %v1640
    %v1775 = vpop.f32.mrf.mxu0
    %v1776 = vadd.f32 %v1604, %v1775
    %v1777 = vpop.f32.mrf.mxu0
    %1778 = vmatprep.mubr.f32.mxu0 0.0
    %1779 = vmatmul.mubr.f32.gmra.mxu0 %v1643
    %v1780 = vpop.f32.mrf.mxu0
    %v1781 = vadd.f32 %v1604, %v1780
    %v1782 = vpop.f32.mrf.mxu0
    %1783 = vmatprep.mubr.f32.mxu0 0.0
    %1784 = vmatmul.mubr.f32.gmra.mxu0 %v1646
    %v1785 = vpop.f32.mrf.mxu0
    %v1786 = vadd.f32 %v1604, %v1785
    %v1787 = vpop.f32.mrf.mxu0
    %1788 = vmatprep.mubr.f32.mxu0 0.0
    %1789 = vmatmul.mubr.f32.gmra.mxu0 %v1649
    %v1790 = vpop.f32.mrf.mxu0
    %v1791 = vadd.f32 %v1604, %v1790
    %v1792 = vpop.f32.mrf.mxu0
    %1793 = vmatprep.mubr.f32.mxu0 0.0
    %1794 = vmatmul.mubr.f32.gmra.mxu0 %v1652
    %v1795 = vpop.f32.mrf.mxu0
    %v1796 = vadd.f32 %v1604, %v1795
    %v1797 = vpop.f32.mrf.mxu0
    %1798 = vdwg.mxu0
    %1799 = vst.msk [vmem:[#allocation2] sm:$0xff] %vm51, %v1721
    %1800 = vst.msk [vmem:[#allocation2 + $0x8] sm:$0xff] %vm51, %v1726
    %1801 = vst.msk [vmem:[#allocation2 + $0x10] sm:$0xff] %vm51, %v1731
    %1802 = vst.msk [vmem:[#allocation2 + $0x18] sm:$0xff] %vm51, %v1736
    %1803 = vst.msk [vmem:[#allocation2 + $0x20] sm:$0xff] %vm51, %v1741
    %1804 = vst.msk [vmem:[#allocation2 + $0x28] sm:$0xff] %vm51, %v1746
    %1805 = vst.msk [vmem:[#allocation2 + $0x30] sm:$0xff] %vm51, %v1751
    %1806 = vst.msk [vmem:[#allocation2 + $0x38] sm:$0xff] %vm51, %v1756
    %1807 = vst.msk [vmem:[#allocation2 + $0x40] sm:$0xff] %vm51, %v1761
    %1808 = vst.msk [vmem:[#allocation2 + $0x48] sm:$0xff] %vm51, %v1766
    %1809 = vst.msk [vmem:[#allocation2 + $0x50] sm:$0xff] %vm51, %v1771
    %1810 = vst.msk [vmem:[#allocation2 + $0x58] sm:$0xff] %vm51, %v1776
    %1811 = vst.msk [vmem:[#allocation2 + $0x60] sm:$0xff] %vm51, %v1781
    %1812 = vst.msk [vmem:[#allocation2 + $0x68] sm:$0xff] %vm51, %v1786
    %1813 = vst.msk [vmem:[#allocation2 + $0x70] sm:$0xff] %vm51, %v1791
    %1814 = vst.msk [vmem:[#allocation2 + $0x78] sm:$0xff] %vm51, %v1796
    // Predicated region
    $region26: #{window_attention_forward.1} parent=1 // pred_check
      _
    $region27: #{window_attention_forward.1} parent=1 // pred_check_branch
      %1816 = sbr.rel (0) target = $region29
    $region28: #{window_attention_forward.1} parent=1 // pred_region
      %s1818 = ssub.s32 2048, 2048
      %1819 = vsyncadd [#allocation3], %s1818
      %s1820 = sshll.u32 [#allocation2], 4
      %s1821 = int_to_ptr.vmem [resolvable:$true] %s1820
      %1826 = dma.vmem_to_hbm [thread:$0]  %s1821, 2048, %s6, [#allocation3], 128, 128, 8
    $region29: #{window_attention_forward.1} parent=1 // pred_fallthru
      _
    // Predicated region
    $region30: #{window_attention_forward.1} parent=1 // pred_check
      _
    $region31: #{window_attention_forward.1} parent=1 // pred_check_branch
      %1828 = sbr.rel (0) target = $region33
    $region32: #{window_attention_forward.1} parent=1 // pred_region
      %1829 = dma.done [#allocation3], 2048
    $region33: #{window_attention_forward.1} parent=1 // pred_fallthru
      _
    %1830 = vsyncpa [#allocation3], 1

</llo_original>
